<compile_context>
chip_gen: v7x
topology: tpu7x:2x2x1
jax: 0.10.0
libtpu: 0.0.40
codegen_flags: <defaults>
</compile_context>

<pallas_src>
import jax
import jax.numpy as jnp
from jax import lax
from jax.experimental import pallas as pl
from jax.experimental.pallas import tpu as pltpu

EPS = 1e-5


# ---------------------------------------------------------------------------
# K1: 1x1 conv (channel-major MXU matmul) + per-tile bn1 partial stats.
# Block = (1, Cin, TP) pixels of one image; output block (1, Cb, TP) bf16.
# ---------------------------------------------------------------------------
def _conv1x1_kernel(x_ref, w_ref, y_ref, st_ref):
    x = x_ref[0].astype(jnp.bfloat16)                       # (Cin, TP)
    y = jnp.dot(w_ref[...], x, preferred_element_type=jnp.float32)   # (Cb, TP) f32
    y_ref[0] = y.astype(y_ref.dtype)                        # lane-dense bf16 store
    s = jnp.sum(y, axis=1, keepdims=True)                   # (Cb, 1) XLU reduce
    ss = jnp.sum(y * y, axis=1, keepdims=True)
    st_ref[0, 0] = jnp.concatenate([s, ss], axis=1)         # single (Cb, 2) store


# ---------------------------------------------------------------------------
# K3: bn2 scale/shift + ReLU + 1x1 conv + per-tile bn3 partial stats.
# ---------------------------------------------------------------------------
def _conv1x1_affine_kernel(x_ref, w_ref, sc_ref, sh_ref, y_ref, st_ref):
    x = jnp.maximum(x_ref[0].astype(jnp.float32) * sc_ref[...] + sh_ref[...], 0.0)
    y = jnp.dot(w_ref[...], x.astype(jnp.bfloat16),
                preferred_element_type=jnp.float32)          # (Cout, TP) f32
    y_ref[0] = y.astype(y_ref.dtype)
    s = jnp.sum(y, axis=1, keepdims=True)
    ss = jnp.sum(y * y, axis=1, keepdims=True)
    st_ref[0, 0] = jnp.concatenate([s, ss], axis=1)


# ---------------------------------------------------------------------------
# K2: bn1 scale/shift + ReLU + 3x3 depthwise conv (pad=1, stride=1).
# Channel-major (C, H*W): dx taps = lane roll by 1, dy taps = lane roll by W;
# boundary validity comes from precomputed 0/1 mask rows (no in-kernel iota).
# ---------------------------------------------------------------------------
def _make_dw_kernel(H, W, C):
    HW = H * W

    def kernel(y1_ref, sc_ref, sh_ref, w2_ref, m_ref, y2_ref, st_ref):
        y = jnp.maximum(y1_ref[0].astype(jnp.float32) * sc_ref[...] + sh_ref[...],
                        0.0)                                 # (C, HW)
        w2 = w2_ref[...]                                     # (C, 9) per-channel taps
        m = m_ref[...]                                       # (4, HW): [w>=1, w<=W-2, h>=1, h<=H-2]

        # dx-shifted columns (lane roll by +-1), out-of-row lanes zeroed.
        col_m1 = pltpu.roll(y, shift=1, axis=1) * m[0:1, :]        # src (h, w-1)
        col_p1 = pltpu.roll(y, shift=HW - 1, axis=1) * m[1:2, :]   # src (h, w+1)

        # dy = 0 row: taps k = 3, 4, 5
        acc = col_m1 * w2[:, 3:4] + y * w2[:, 4:5] + col_p1 * w2[:, 5:6]

        # dy = -1 row (src h-1): roll by W, taps k = 0, 1, 2, masked by (h >= 1)
        r = (pltpu.roll(col_m1, shift=W, axis=1) * w2[:, 0:1]
             + pltpu.roll(y, shift=W, axis=1) * w2[:, 1:2]
             + pltpu.roll(col_p1, shift=W, axis=1) * w2[:, 2:3])
        acc = acc + r * m[2:3, :]

        # dy = +1 row (src h+1): roll by HW-W, taps k = 6, 7, 8, masked by (h <= H-2)
        r = (pltpu.roll(col_m1, shift=HW - W, axis=1) * w2[:, 6:7]
             + pltpu.roll(y, shift=HW - W, axis=1) * w2[:, 7:8]
             + pltpu.roll(col_p1, shift=HW - W, axis=1) * w2[:, 8:9])
        acc = acc + r * m[3:4, :]

        y2_ref[0] = acc.astype(y2_ref.dtype)
        s = jnp.sum(acc, axis=1, keepdims=True)
        ss = jnp.sum(acc * acc, axis=1, keepdims=True)
        st_ref[0] = jnp.concatenate([s, ss], axis=1)

    return kernel


# ---------------------------------------------------------------------------
# K4: bn3 scale/shift + residual + ReLU (channel-major, lane-dense stores).
# ---------------------------------------------------------------------------
def _final_kernel(y3_ref, x_ref, sc_ref, sh_ref, o_ref):
    o_ref[0] = jnp.maximum(
        y3_ref[0].astype(jnp.float32) * sc_ref[...] + sh_ref[...] + x_ref[0], 0.0)


# ---------------------------------------------------------------------------
# Wrapper
# ---------------------------------------------------------------------------
def _fold_bn(stats, count, gamma, beta):
    """stats: (C, 2) = (sum, sumsq) over N*H*W -> per-channel (scale, shift)."""
    mean = stats[:, 0] / count
    var = jnp.maximum(stats[:, 1] / count - mean * mean, 0.0)
    scale = gamma * lax.rsqrt(var + EPS)
    shift = beta - mean * scale
    return scale, shift


def _pick_pixel_tile(HW, target=2048):
    """Largest divisor of HW that is a multiple of 128 and <= target (else HW)."""
    if HW <= target or HW % 128 != 0:
        return HW
    for tp in range(target, 0, -128):
        if HW % tp == 0:
            return tp
    return HW


def bottleneckx_forward(x_nchw, params):
    """x_nchw: (N, Cin, H, W) float32. Returns (N, Cout, H, W) float32."""
    w1, g1, b1, w2, g2, b2, w3, g3, b3 = params
    Cin, Cb = w1.shape
    Cout = w3.shape[1]
    N, Cx, H, W = x_nchw.shape
    assert Cx == Cin and Cin == Cout, "residual path requires inplanes == planes"
    assert w2.shape == (3, 3, 1, Cb), "conv2 must be depthwise (planes == cardinality)"

    HW = H * W
    count = float(N * H * W)

    # Channel-major (NCHW native): a free reshape, no HBM transpose passes.
    x = x_nchw.reshape(N, Cin, HW)

    TP = _pick_pixel_tile(HW)
    PT = HW // TP

    w1t = jnp.transpose(w1).astype(jnp.bfloat16)        # (Cb, Cin)
    w3t = jnp.transpose(w3).astype(jnp.bfloat16)        # (Cout, Cb)
    w2cm = jnp.transpose(w2.reshape(9, Cb))             # (Cb, 9), k = (dy+1)*3 + (dx+1)

    pix = jnp.arange(HW, dtype=jnp.int32)
    wpos = pix % W
    hpos = pix // W
    masks = jnp.stack([wpos >= 1, wpos <= W - 2, hpos >= 1, hpos <= H - 2],
                      axis=0).astype(jnp.float32)       # (4, HW)

    vmem_cap = 48 * 1024 * 1024                          # fits v7x's 64 MiB VMEM
    cp2 = pltpu.CompilerParams(dimension_semantics=("parallel", "parallel"),
                               vmem_limit_bytes=vmem_cap)
    cp1 = pltpu.CompilerParams(dimension_semantics=("parallel",),
                               vmem_limit_bytes=vmem_cap)

    img_px = lambda n, t: (n, 0, t)     # (image, pixel-tile) block
    rep2 = lambda n, t: (0, 0)          # grid-invariant weights / scale / shift
    st_map = lambda n, t: (n, t, 0, 0)  # per-(image, tile) stats partials

    # ---- K1: conv1 (1x1) + bn1 partial stats --------------------------------
    y1, st1 = pl.pallas_call(
        _conv1x1_kernel,
        grid=(N, PT),
        in_specs=[pl.BlockSpec((1, Cin, TP), img_px),
                  pl.BlockSpec((Cb, Cin), rep2)],
        out_specs=[pl.BlockSpec((1, Cb, TP), img_px),
                   pl.BlockSpec((1, 1, Cb, 2), st_map)],
        out_shape=[jax.ShapeDtypeStruct((N, Cb, HW), jnp.bfloat16),
                   jax.ShapeDtypeStruct((N, PT, Cb, 2), jnp.float32)],
        compiler_params=cp2,
    )(x, w1t)
    sc1, sh1 = _fold_bn(jnp.sum(st1, axis=(0, 1)), count, g1, b1)

    # ---- K2: bn1 + relu + 3x3 depthwise + bn2 partial stats -----------------
    y2, st2 = pl.pallas_call(
        _make_dw_kernel(H, W, Cb),
        grid=(N,),
        in_specs=[pl.BlockSpec((1, Cb, HW), lambda n: (n, 0, 0)),
                  pl.BlockSpec((Cb, 1), lambda n: (0, 0)),
                  pl.BlockSpec((Cb, 1), lambda n: (0, 0)),
                  pl.BlockSpec((Cb, 9), lambda n: (0, 0)),
                  pl.BlockSpec((4, HW), lambda n: (0, 0))],
        out_specs=[pl.BlockSpec((1, Cb, HW), lambda n: (n, 0, 0)),
                   pl.BlockSpec((1, Cb, 2), lambda n: (n, 0, 0))],
        out_shape=[jax.ShapeDtypeStruct((N, Cb, HW), jnp.bfloat16),
                   jax.ShapeDtypeStruct((N, Cb, 2), jnp.float32)],
        compiler_params=cp1,
    )(y1, sc1.reshape(Cb, 1), sh1.reshape(Cb, 1), w2cm, masks)
    sc2, sh2 = _fold_bn(jnp.sum(st2, axis=0), count, g2, b2)

    # ---- K3: bn2 + relu + conv3 (1x1) + bn3 partial stats -------------------
    y3, st3 = pl.pallas_call(
        _conv1x1_affine_kernel,
        grid=(N, PT),
        in_specs=[pl.BlockSpec((1, Cb, TP), img_px),
                  pl.BlockSpec((Cout, Cb), rep2),
                  pl.BlockSpec((Cb, 1), rep2),
                  pl.BlockSpec((Cb, 1), rep2)],
        out_specs=[pl.BlockSpec((1, Cout, TP), img_px),
                   pl.BlockSpec((1, 1, Cout, 2), st_map)],
        out_shape=[jax.ShapeDtypeStruct((N, Cout, HW), jnp.bfloat16),
                   jax.ShapeDtypeStruct((N, PT, Cout, 2), jnp.float32)],
        compiler_params=cp2,
    )(y2, w3t, sc2.reshape(Cb, 1), sh2.reshape(Cb, 1))
    sc3, sh3 = _fold_bn(jnp.sum(st3, axis=(0, 1)), count, g3, b3)

    # ---- K4: bn3 + residual + relu ------------------------------------------
    out = pl.pallas_call(
        _final_kernel,
        grid=(N, PT),
        in_specs=[pl.BlockSpec((1, Cout, TP), img_px),
                  pl.BlockSpec((1, Cout, TP), img_px),
                  pl.BlockSpec((Cout, 1), rep2),
                  pl.BlockSpec((Cout, 1), rep2)],
        out_specs=pl.BlockSpec((1, Cout, TP), img_px),
        out_shape=jax.ShapeDtypeStruct((N, Cout, HW), jnp.float32),
        compiler_params=cp2,
    )(y3, x, sc3.reshape(Cout, 1), sh3.reshape(Cout, 1))

    return out.reshape(N, Cout, H, W)


# ---------------- pure-JAX reference (for the correctness check) ------------
def _ref_bn(y, gamma, beta):
    mean = jnp.mean(y, axis=(0, 1, 2), keepdims=True)
    var = jnp.mean((y - mean) ** 2, axis=(0, 1, 2), keepdims=True)
    return (y - mean) * lax.rsqrt(var + EPS) * gamma.reshape(1, 1, 1, -1) \
        + beta.reshape(1, 1, 1, -1)


def bottleneckx_reference(x_nchw, params):
    w1, g1, b1, w2, g2, b2, w3, g3, b3 = params
    x = jnp.transpose(x_nchw, (0, 2, 3, 1))
    Cin = x.shape[-1]
    Cb = w1.shape[1]
    Cout = w3.shape[1]
    dn = ('NHWC', 'HWIO', 'NHWC')
    hi = lax.Precision.HIGHEST

    y = lax.conv_general_dilated(x, w1.reshape(1, 1, Cin, Cb), (1, 1), 'VALID',
                                 dimension_numbers=dn, precision=hi)
    y = jnp.maximum(_ref_bn(y, g1, b1), 0.0)
    y = lax.conv_general_dilated(y, w2, (1, 1), ((1, 1), (1, 1)),
                                 dimension_numbers=dn, feature_group_count=Cb,
                                 precision=hi)
    y = jnp.maximum(_ref_bn(y, g2, b2), 0.0)
    y = lax.conv_general_dilated(y, w3.reshape(1, 1, Cb, Cout), (1, 1), 'VALID',
                                 dimension_numbers=dn, precision=hi)
    y = jnp.maximum(_ref_bn(y, g3, b3) + x, 0.0)
    return jnp.transpose(y, (0, 3, 1, 2))


if __name__ == "__main__":
    # Module defaults: cardinality=32 -> bottle_planes = planes; depthwise
    # conv2 and residual=x require planes == 32 == inplanes, stride=1.
    N, H, W = 2, 16, 16
    inplanes = planes = 32
    Cb = planes

    key = jax.random.PRNGKey(0)
    ks = jax.random.split(key, 10)
    x = jax.random.normal(ks[0], (N, inplanes, H, W), jnp.float32)

    w1 = 0.1 * jax.random.normal(ks[1], (inplanes, Cb), jnp.float32)    # conv1 1x1
    w2 = 0.1 * jax.random.normal(ks[2], (3, 3, 1, Cb), jnp.float32)     # conv2 depthwise (HWIO)
    w3 = 0.1 * jax.random.normal(ks[3], (Cb, planes), jnp.float32)      # conv3 1x1
    g1 = 1.0 + 0.1 * jax.random.normal(ks[4], (Cb,), jnp.float32)
    b1 = 0.1 * jax.random.normal(ks[5], (Cb,), jnp.float32)
    g2 = 1.0 + 0.1 * jax.random.normal(ks[6], (Cb,), jnp.float32)
    b2 = 0.1 * jax.random.normal(ks[7], (Cb,), jnp.float32)
    g3 = 1.0 + 0.1 * jax.random.normal(ks[8], (planes,), jnp.float32)
    b3 = 0.1 * jax.random.normal(ks[9], (planes,), jnp.float32)
    params = (w1, g1, b1, w2, g2, b2, w3, g3, b3)

    out = jax.block_until_ready(jax.jit(bottleneckx_forward)(x, params))
    ref = jax.block_until_ready(bottleneckx_reference(x, params))

    assert out.shape == (N, planes, H, W), out.shape
    max_err = float(jnp.max(jnp.abs(out - ref)))
    mean_err = float(jnp.mean(jnp.abs(out - ref)))
    # Tolerance reflects bf16 MXU matmuls AND bf16-stored intermediates
    # (y1/y2/y3) vs the f32 HIGHEST-precision reference; structural bugs
    # (wrong taps / masks / BN) produce O(1) errors and still fail these.
    assert max_err < 1.5e-1, f"mismatch vs reference: max abs err = {max_err}"
    assert mean_err < 1.5e-2, f"mismatch vs reference: mean abs err = {mean_err}"

    print("KERNEL_OK")
</pallas_src>

<mosaic_0001>
module attributes {stable_mosaic.version = 11 : i64} {
  func.func @_conv1x1_kernel(%arg0: i32, %arg1: i32, %arg2: memref<1x32x256xf32, #tpu.memory_space<vmem>>, %arg3: memref<32x32xbf16, #tpu.memory_space<vmem>>, %arg4: memref<1x32x256xbf16, #tpu.memory_space<vmem>>, %arg5: memref<1x1x32x2xf32, #tpu.memory_space<vmem>>) attributes {dimension_semantics = [#tpu.dimension_semantics<parallel>, #tpu.dimension_semantics<parallel>], iteration_bounds = array<i64: 2, 1>, scalar_prefetch = 0 : i64, scratch_operands = 0 : i64, tpu.core_type = #tpu.core_type<tc>, window_params = [{transform_indices = @transform_0, window_bounds = array<i64: 1, 32, 256>}, {pipeline_mode = #tpu.pipeline_mode<synchronous>, transform_indices = @transform_1, window_bounds = array<i64: 32, 32>}, {transform_indices = @transform_2, window_bounds = array<i64: 1, 32, 256>}, {transform_indices = @transform_3, window_bounds = array<i64: 1, 1, 32, 2>}]} {
    %c0 = arith.constant 0 : index
    %c0_0 = arith.constant 0 : index
    %c0_1 = arith.constant 0 : index
    %0 = vector.load %arg2[%c0, %c0_0, %c0_1] : memref<1x32x256xf32, #tpu.memory_space<vmem>>, vector<1x32x256xf32>
    %1 = vector.shape_cast %0 : vector<1x32x256xf32> to vector<32x256xf32>
    %2 = arith.truncf %1 : vector<32x256xf32> to vector<32x256xbf16>
    %c0_2 = arith.constant 0 : index
    %c0_3 = arith.constant 0 : index
    %3 = vector.load %arg3[%c0_2, %c0_3] : memref<32x32xbf16, #tpu.memory_space<vmem>>, vector<32x32xbf16>
    %cst = arith.constant dense<0.000000e+00> : vector<32x256xf32>
    %4 = tpu.matmul %3, %2, %cst {dimension_numbers = #tpu.dot_dimension_numbers<[1], [0], [0], [1], [0, 0, 1, 1], [], []>} : vector<32x32xbf16>, vector<32x256xbf16>, vector<32x256xf32> -> vector<32x256xf32>
    %5 = arith.truncf %4 : vector<32x256xf32> to vector<32x256xbf16>
    %c0_4 = arith.constant 0 : index
    %c0_5 = arith.constant 0 : index
    %c0_6 = arith.constant 0 : index
    %6 = vector.load %arg4[%c0_4, %c0_5, %c0_6] : memref<1x32x256xbf16, #tpu.memory_space<vmem>>, vector<1x32x256xbf16>
    %7 = vector.shape_cast %6 : vector<1x32x256xbf16> to vector<32x256xbf16>
    %8 = vector.shape_cast %5 : vector<32x256xbf16> to vector<1x32x256xbf16>
    tpu.vector_store %arg4[%c0_4, %c0_5, %c0_6], %8 {strides = array<i32>} : memref<1x32x256xbf16, #tpu.memory_space<vmem>>, vector<1x32x256xbf16>,
    %cst_7 = arith.constant dense<0.000000e+00> : vector<32xf32>
    %9 = vector.multi_reduction <add>, %4, %cst_7 [1] : vector<32x256xf32> to vector<32xf32>
    %10 = vector.shape_cast %9 : vector<32xf32> to vector<32x1xf32>
    %11 = arith.mulf %4, %4 : vector<32x256xf32>
    %cst_8 = arith.constant dense<0.000000e+00> : vector<32xf32>
    %12 = vector.multi_reduction <add>, %11, %cst_8 [1] : vector<32x256xf32> to vector<32xf32>
    %13 = vector.shape_cast %12 : vector<32xf32> to vector<32x1xf32>
    %14 = tpu.concatenate %10, %13 in 1 : vector<32x1xf32>, vector<32x1xf32> -> vector<32x2xf32>
    %c0_9 = arith.constant 0 : index
    %c0_10 = arith.constant 0 : index
    %c0_11 = arith.constant 0 : index
    %c0_12 = arith.constant 0 : index
    %15 = vector.load %arg5[%c0_9, %c0_10, %c0_11, %c0_12] : memref<1x1x32x2xf32, #tpu.memory_space<vmem>>, vector<1x1x32x2xf32>
    %16 = vector.shape_cast %15 : vector<1x1x32x2xf32> to vector<32x2xf32>
    %17 = vector.shape_cast %14 : vector<32x2xf32> to vector<1x1x32x2xf32>
    tpu.vector_store %arg5[%c0_9, %c0_10, %c0_11, %c0_12], %17 {strides = array<i32>} : memref<1x1x32x2xf32, #tpu.memory_space<vmem>>, vector<1x1x32x2xf32>,
    return
  }
  func.func @transform_0(%arg0: i32, %arg1: i32) -> (i32, i32, i32) {
    %c0_i32 = arith.constant 0 : i32
    %c0_i32_0 = arith.constant 0 : i32
    return %arg0, %c0_i32, %arg1 : i32, i32, i32
  }
  func.func @transform_1(%arg0: i32, %arg1: i32) -> (i32, i32) {
    %c0_i32 = arith.constant 0 : i32
    %c0_i32_0 = arith.constant 0 : i32
    %c0_i32_1 = arith.constant 0 : i32
    return %c0_i32, %c0_i32_0 : i32, i32
  }
  func.func @transform_2(%arg0: i32, %arg1: i32) -> (i32, i32, i32) {
    %c0_i32 = arith.constant 0 : i32
    %c0_i32_0 = arith.constant 0 : i32
    return %arg0, %c0_i32, %arg1 : i32, i32, i32
  }
  func.func @transform_3(%arg0: i32, %arg1: i32) -> (i32, i32, i32, i32) {
    %c0_i32 = arith.constant 0 : i32
    %c0_i32_0 = arith.constant 0 : i32
    %c0_i32_1 = arith.constant 0 : i32
    return %arg0, %arg1, %c0_i32, %c0_i32_0 : i32, i32, i32, i32
  }
}

module attributes {stable_mosaic.version = 11 : i64} {
  func.func @_conv1x1_affine_kernel(%arg0: i32, %arg1: i32, %arg2: memref<1x32x256xbf16, #tpu.memory_space<vmem>>, %arg3: memref<32x32xbf16, #tpu.memory_space<vmem>>, %arg4: memref<32x1xf32, #tpu.memory_space<vmem>>, %arg5: memref<32x1xf32, #tpu.memory_space<vmem>>, %arg6: memref<1x32x256xbf16, #tpu.memory_space<vmem>>, %arg7: memref<1x1x32x2xf32, #tpu.memory_space<vmem>>) attributes {dimension_semantics = [#tpu.dimension_semantics<parallel>, #tpu.dimension_semantics<parallel>], iteration_bounds = array<i64: 2, 1>, scalar_prefetch = 0 : i64, scratch_operands = 0 : i64, tpu.core_type = #tpu.core_type<tc>, window_params = [{transform_indices = @transform_0, window_bounds = array<i64: 1, 32, 256>}, {pipeline_mode = #tpu.pipeline_mode<synchronous>, transform_indices = @transform_1, window_bounds = array<i64: 32, 32>}, {pipeline_mode = #tpu.pipeline_mode<synchronous>, transform_indices = @transform_2, window_bounds = array<i64: 32, 1>}, {pipeline_mode = #tpu.pipeline_mode<synchronous>, transform_indices = @transform_3, window_bounds = array<i64: 32, 1>}, {transform_indices = @transform_4, window_bounds = array<i64: 1, 32, 256>}, {transform_indices = @transform_5, window_bounds = array<i64: 1, 1, 32, 2>}]} {
    %c0 = arith.constant 0 : index
    %c0_0 = arith.constant 0 : index
    %c0_1 = arith.constant 0 : index
    %0 = vector.load %arg2[%c0, %c0_0, %c0_1] : memref<1x32x256xbf16, #tpu.memory_space<vmem>>, vector<1x32x256xbf16>
    %1 = vector.shape_cast %0 : vector<1x32x256xbf16> to vector<32x256xbf16>
    %2 = arith.extf %1 : vector<32x256xbf16> to vector<32x256xf32>
    %c0_2 = arith.constant 0 : index
    %c0_3 = arith.constant 0 : index
    %3 = vector.load %arg4[%c0_2, %c0_3] : memref<32x1xf32, #tpu.memory_space<vmem>>, vector<32x1xf32>
    %4 = vector.broadcast %3 : vector<32x1xf32> to vector<32x256xf32>
    %5 = arith.mulf %2, %4 : vector<32x256xf32>
    %c0_4 = arith.constant 0 : index
    %c0_5 = arith.constant 0 : index
    %6 = vector.load %arg5[%c0_4, %c0_5] : memref<32x1xf32, #tpu.memory_space<vmem>>, vector<32x1xf32>
    %7 = vector.broadcast %6 : vector<32x1xf32> to vector<32x256xf32>
    %8 = arith.addf %5, %7 : vector<32x256xf32>
    %cst = arith.constant 0.000000e+00 : f32
    %9 = vector.broadcast %cst : f32 to vector<32x256xf32>
    %10 = arith.maximumf %8, %9 : vector<32x256xf32>
    %c0_6 = arith.constant 0 : index
    %c0_7 = arith.constant 0 : index
    %11 = vector.load %arg3[%c0_6, %c0_7] : memref<32x32xbf16, #tpu.memory_space<vmem>>, vector<32x32xbf16>
    %12 = arith.truncf %10 : vector<32x256xf32> to vector<32x256xbf16>
    %cst_8 = arith.constant dense<0.000000e+00> : vector<32x256xf32>
    %13 = tpu.matmul %11, %12, %cst_8 {dimension_numbers = #tpu.dot_dimension_numbers<[1], [0], [0], [1], [0, 0, 1, 1], [], []>} : vector<32x32xbf16>, vector<32x256xbf16>, vector<32x256xf32> -> vector<32x256xf32>
    %14 = arith.truncf %13 : vector<32x256xf32> to vector<32x256xbf16>
    %c0_9 = arith.constant 0 : index
    %c0_10 = arith.constant 0 : index
    %c0_11 = arith.constant 0 : index
    %15 = vector.load %arg6[%c0_9, %c0_10, %c0_11] : memref<1x32x256xbf16, #tpu.memory_space<vmem>>, vector<1x32x256xbf16>
    %16 = vector.shape_cast %15 : vector<1x32x256xbf16> to vector<32x256xbf16>
    %17 = vector.shape_cast %14 : vector<32x256xbf16> to vector<1x32x256xbf16>
    tpu.vector_store %arg6[%c0_9, %c0_10, %c0_11], %17 {strides = array<i32>} : memref<1x32x256xbf16, #tpu.memory_space<vmem>>, vector<1x32x256xbf16>,
    %cst_12 = arith.constant dense<0.000000e+00> : vector<32xf32>
    %18 = vector.multi_reduction <add>, %13, %cst_12 [1] : vector<32x256xf32> to vector<32xf32>
    %19 = vector.shape_cast %18 : vector<32xf32> to vector<32x1xf32>
    %20 = arith.mulf %13, %13 : vector<32x256xf32>
    %cst_13 = arith.constant dense<0.000000e+00> : vector<32xf32>
    %21 = vector.multi_reduction <add>, %20, %cst_13 [1] : vector<32x256xf32> to vector<32xf32>
    %22 = vector.shape_cast %21 : vector<32xf32> to vector<32x1xf32>
    %23 = tpu.concatenate %19, %22 in 1 : vector<32x1xf32>, vector<32x1xf32> -> vector<32x2xf32>
    %c0_14 = arith.constant 0 : index
    %c0_15 = arith.constant 0 : index
    %c0_16 = arith.constant 0 : index
    %c0_17 = arith.constant 0 : index
    %24 = vector.load %arg7[%c0_14, %c0_15, %c0_16, %c0_17] : memref<1x1x32x2xf32, #tpu.memory_space<vmem>>, vector<1x1x32x2xf32>
    %25 = vector.shape_cast %24 : vector<1x1x32x2xf32> to vector<32x2xf32>
    %26 = vector.shape_cast %23 : vector<32x2xf32> to vector<1x1x32x2xf32>
    tpu.vector_store %arg7[%c0_14, %c0_15, %c0_16, %c0_17], %26 {strides = array<i32>} : memref<1x1x32x2xf32, #tpu.memory_space<vmem>>, vector<1x1x32x2xf32>,
    return
  }
  func.func @transform_0(%arg0: i32, %arg1: i32) -> (i32, i32, i32) {
    %c0_i32 = arith.constant 0 : i32
    %c0_i32_0 = arith.constant 0 : i32
    return %arg0, %c0_i32, %arg1 : i32, i32, i32
  }
  func.func @transform_1(%arg0: i32, %arg1: i32) -> (i32, i32) {
    %c0_i32 = arith.constant 0 : i32
    %c0_i32_0 = arith.constant 0 : i32
    %c0_i32_1 = arith.constant 0 : i32
    return %c0_i32, %c0_i32_0 : i32, i32
  }
  func.func @transform_2(%arg0: i32, %arg1: i32) -> (i32, i32) {
    %c0_i32 = arith.constant 0 : i32
    %c0_i32_0 = arith.constant 0 : i32
    %c0_i32_1 = arith.constant 0 : i32
    return %c0_i32, %c0_i32_0 : i32, i32
  }
  func.func @transform_3(%arg0: i32, %arg1: i32) -> (i32, i32) {
    %c0_i32 = arith.constant 0 : i32
    %c0_i32_0 = arith.constant 0 : i32
    %c0_i32_1 = arith.constant 0 : i32
    return %c0_i32, %c0_i32_0 : i32, i32
  }
  func.func @transform_4(%arg0: i32, %arg1: i32) -> (i32, i32, i32) {
    %c0_i32 = arith.constant 0 : i32
    %c0_i32_0 = arith.constant 0 : i32
    return %arg0, %c0_i32, %arg1 : i32, i32, i32
  }
  func.func @transform_5(%arg0: i32, %arg1: i32) -> (i32, i32, i32, i32) {
    %c0_i32 = arith.constant 0 : i32
    %c0_i32_0 = arith.constant 0 : i32
    %c0_i32_1 = arith.constant 0 : i32
    return %arg0, %arg1, %c0_i32, %c0_i32_0 : i32, i32, i32, i32
  }
}

module attributes {stable_mosaic.version = 11 : i64} {
  func.func @kernel(%arg0: i32, %arg1: memref<1x32x256xbf16, #tpu.memory_space<vmem>>, %arg2: memref<32x1xf32, #tpu.memory_space<vmem>>, %arg3: memref<32x1xf32, #tpu.memory_space<vmem>>, %arg4: memref<32x9xf32, #tpu.memory_space<vmem>>, %arg5: memref<4x256xf32, #tpu.memory_space<vmem>>, %arg6: memref<1x32x256xbf16, #tpu.memory_space<vmem>>, %arg7: memref<1x32x2xf32, #tpu.memory_space<vmem>>) attributes {dimension_semantics = [#tpu.dimension_semantics<parallel>], iteration_bounds = array<i64: 2>, scalar_prefetch = 0 : i64, scratch_operands = 0 : i64, tpu.core_type = #tpu.core_type<tc>, window_params = [{transform_indices = @transform_0, window_bounds = array<i64: 1, 32, 256>}, {pipeline_mode = #tpu.pipeline_mode<synchronous>, transform_indices = @transform_1, window_bounds = array<i64: 32, 1>}, {pipeline_mode = #tpu.pipeline_mode<synchronous>, transform_indices = @transform_2, window_bounds = array<i64: 32, 1>}, {pipeline_mode = #tpu.pipeline_mode<synchronous>, transform_indices = @transform_3, window_bounds = array<i64: 32, 9>}, {pipeline_mode = #tpu.pipeline_mode<synchronous>, transform_indices = @transform_4, window_bounds = array<i64: 4, 256>}, {transform_indices = @transform_5, window_bounds = array<i64: 1, 32, 256>}, {transform_indices = @transform_6, window_bounds = array<i64: 1, 32, 2>}]} {
    %c0 = arith.constant 0 : index
    %c0_0 = arith.constant 0 : index
    %c0_1 = arith.constant 0 : index
    %0 = vector.load %arg1[%c0, %c0_0, %c0_1] : memref<1x32x256xbf16, #tpu.memory_space<vmem>>, vector<1x32x256xbf16>
    %1 = vector.shape_cast %0 : vector<1x32x256xbf16> to vector<32x256xbf16>
    %2 = arith.extf %1 : vector<32x256xbf16> to vector<32x256xf32>
    %c0_2 = arith.constant 0 : index
    %c0_3 = arith.constant 0 : index
    %3 = vector.load %arg2[%c0_2, %c0_3] : memref<32x1xf32, #tpu.memory_space<vmem>>, vector<32x1xf32>
    %4 = vector.broadcast %3 : vector<32x1xf32> to vector<32x256xf32>
    %5 = arith.mulf %2, %4 : vector<32x256xf32>
    %c0_4 = arith.constant 0 : index
    %c0_5 = arith.constant 0 : index
    %6 = vector.load %arg3[%c0_4, %c0_5] : memref<32x1xf32, #tpu.memory_space<vmem>>, vector<32x1xf32>
    %7 = vector.broadcast %6 : vector<32x1xf32> to vector<32x256xf32>
    %8 = arith.addf %5, %7 : vector<32x256xf32>
    %cst = arith.constant 0.000000e+00 : f32
    %9 = vector.broadcast %cst : f32 to vector<32x256xf32>
    %10 = arith.maximumf %8, %9 : vector<32x256xf32>
    %c0_6 = arith.constant 0 : index
    %c0_7 = arith.constant 0 : index
    %11 = vector.load %arg4[%c0_6, %c0_7] : memref<32x9xf32, #tpu.memory_space<vmem>>, vector<32x9xf32>
    %c0_8 = arith.constant 0 : index
    %c0_9 = arith.constant 0 : index
    %12 = vector.load %arg5[%c0_8, %c0_9] : memref<4x256xf32, #tpu.memory_space<vmem>>, vector<4x256xf32>
    %c1_i32 = arith.constant 1 : i32
    %13 = tpu.dynamic_rotate %10 by %c1_i32 dim 1 : vector<32x256xf32>, i32 -> vector<32x256xf32>
    %14 = vector.extract_strided_slice %12 {offsets = [0, 0], sizes = [1, 256], strides = [1, 1]} : vector<4x256xf32> to vector<1x256xf32>
    %15 = vector.broadcast %14 : vector<1x256xf32> to vector<32x256xf32>
    %16 = arith.mulf %13, %15 : vector<32x256xf32>
    %c255_i32 = arith.constant 255 : i32
    %17 = tpu.dynamic_rotate %10 by %c255_i32 dim 1 : vector<32x256xf32>, i32 -> vector<32x256xf32>
    %18 = vector.extract_strided_slice %12 {offsets = [1, 0], sizes = [1, 256], strides = [1, 1]} : vector<4x256xf32> to vector<1x256xf32>
    %19 = vector.broadcast %18 : vector<1x256xf32> to vector<32x256xf32>
    %20 = arith.mulf %17, %19 : vector<32x256xf32>
    %21 = vector.extract_strided_slice %11 {offsets = [0, 3], sizes = [32, 1], strides = [1, 1]} : vector<32x9xf32> to vector<32x1xf32>
    %22 = vector.broadcast %21 : vector<32x1xf32> to vector<32x256xf32>
    %23 = arith.mulf %16, %22 : vector<32x256xf32>
    %24 = vector.extract_strided_slice %11 {offsets = [0, 4], sizes = [32, 1], strides = [1, 1]} : vector<32x9xf32> to vector<32x1xf32>
    %25 = vector.broadcast %24 : vector<32x1xf32> to vector<32x256xf32>
    %26 = arith.mulf %10, %25 : vector<32x256xf32>
    %27 = arith.addf %23, %26 : vector<32x256xf32>
    %28 = vector.extract_strided_slice %11 {offsets = [0, 5], sizes = [32, 1], strides = [1, 1]} : vector<32x9xf32> to vector<32x1xf32>
    %29 = vector.broadcast %28 : vector<32x1xf32> to vector<32x256xf32>
    %30 = arith.mulf %20, %29 : vector<32x256xf32>
    %31 = arith.addf %27, %30 : vector<32x256xf32>
    %c16_i32 = arith.constant 16 : i32
    %32 = tpu.dynamic_rotate %16 by %c16_i32 dim 1 : vector<32x256xf32>, i32 -> vector<32x256xf32>
    %33 = vector.extract_strided_slice %11 {offsets = [0, 0], sizes = [32, 1], strides = [1, 1]} : vector<32x9xf32> to vector<32x1xf32>
    %34 = vector.broadcast %33 : vector<32x1xf32> to vector<32x256xf32>
    %35 = arith.mulf %32, %34 : vector<32x256xf32>
    %c16_i32_10 = arith.constant 16 : i32
    %36 = tpu.dynamic_rotate %10 by %c16_i32_10 dim 1 : vector<32x256xf32>, i32 -> vector<32x256xf32>
    %37 = vector.extract_strided_slice %11 {offsets = [0, 1], sizes = [32, 1], strides = [1, 1]} : vector<32x9xf32> to vector<32x1xf32>
    %38 = vector.broadcast %37 : vector<32x1xf32> to vector<32x256xf32>
    %39 = arith.mulf %36, %38 : vector<32x256xf32>
    %40 = arith.addf %35, %39 : vector<32x256xf32>
    %c16_i32_11 = arith.constant 16 : i32
    %41 = tpu.dynamic_rotate %20 by %c16_i32_11 dim 1 : vector<32x256xf32>, i32 -> vector<32x256xf32>
    %42 = vector.extract_strided_slice %11 {offsets = [0, 2], sizes = [32, 1], strides = [1, 1]} : vector<32x9xf32> to vector<32x1xf32>
    %43 = vector.broadcast %42 : vector<32x1xf32> to vector<32x256xf32>
    %44 = arith.mulf %41, %43 : vector<32x256xf32>
    %45 = arith.addf %40, %44 : vector<32x256xf32>
    %46 = vector.extract_strided_slice %12 {offsets = [2, 0], sizes = [1, 256], strides = [1, 1]} : vector<4x256xf32> to vector<1x256xf32>
    %47 = vector.broadcast %46 : vector<1x256xf32> to vector<32x256xf32>
    %48 = arith.mulf %45, %47 : vector<32x256xf32>
    %49 = arith.addf %31, %48 : vector<32x256xf32>
    %c240_i32 = arith.constant 240 : i32
    %50 = tpu.dynamic_rotate %16 by %c240_i32 dim 1 : vector<32x256xf32>, i32 -> vector<32x256xf32>
    %51 = vector.extract_strided_slice %11 {offsets = [0, 6], sizes = [32, 1], strides = [1, 1]} : vector<32x9xf32> to vector<32x1xf32>
    %52 = vector.broadcast %51 : vector<32x1xf32> to vector<32x256xf32>
    %53 = arith.mulf %50, %52 : vector<32x256xf32>
    %c240_i32_12 = arith.constant 240 : i32
    %54 = tpu.dynamic_rotate %10 by %c240_i32_12 dim 1 : vector<32x256xf32>, i32 -> vector<32x256xf32>
    %55 = vector.extract_strided_slice %11 {offsets = [0, 7], sizes = [32, 1], strides = [1, 1]} : vector<32x9xf32> to vector<32x1xf32>
    %56 = vector.broadcast %55 : vector<32x1xf32> to vector<32x256xf32>
    %57 = arith.mulf %54, %56 : vector<32x256xf32>
    %58 = arith.addf %53, %57 : vector<32x256xf32>
    %c240_i32_13 = arith.constant 240 : i32
    %59 = tpu.dynamic_rotate %20 by %c240_i32_13 dim 1 : vector<32x256xf32>, i32 -> vector<32x256xf32>
    %60 = vector.extract_strided_slice %11 {offsets = [0, 8], sizes = [32, 1], strides = [1, 1]} : vector<32x9xf32> to vector<32x1xf32>
    %61 = vector.broadcast %60 : vector<32x1xf32> to vector<32x256xf32>
    %62 = arith.mulf %59, %61 : vector<32x256xf32>
    %63 = arith.addf %58, %62 : vector<32x256xf32>
    %64 = vector.extract_strided_slice %12 {offsets = [3, 0], sizes = [1, 256], strides = [1, 1]} : vector<4x256xf32> to vector<1x256xf32>
    %65 = vector.broadcast %64 : vector<1x256xf32> to vector<32x256xf32>
    %66 = arith.mulf %63, %65 : vector<32x256xf32>
    %67 = arith.addf %49, %66 : vector<32x256xf32>
    %68 = arith.truncf %67 : vector<32x256xf32> to vector<32x256xbf16>
    %c0_14 = arith.constant 0 : index
    %c0_15 = arith.constant 0 : index
    %c0_16 = arith.constant 0 : index
    %69 = vector.load %arg6[%c0_14, %c0_15, %c0_16] : memref<1x32x256xbf16, #tpu.memory_space<vmem>>, vector<1x32x256xbf16>
    %70 = vector.shape_cast %69 : vector<1x32x256xbf16> to vector<32x256xbf16>
    %71 = vector.shape_cast %68 : vector<32x256xbf16> to vector<1x32x256xbf16>
    tpu.vector_store %arg6[%c0_14, %c0_15, %c0_16], %71 {strides = array<i32>} : memref<1x32x256xbf16, #tpu.memory_space<vmem>>, vector<1x32x256xbf16>,
    %cst_17 = arith.constant dense<0.000000e+00> : vector<32xf32>
    %72 = vector.multi_reduction <add>, %67, %cst_17 [1] : vector<32x256xf32> to vector<32xf32>
    %73 = vector.shape_cast %72 : vector<32xf32> to vector<32x1xf32>
    %74 = arith.mulf %67, %67 : vector<32x256xf32>
    %cst_18 = arith.constant dense<0.000000e+00> : vector<32xf32>
    %75 = vector.multi_reduction <add>, %74, %cst_18 [1] : vector<32x256xf32> to vector<32xf32>
    %76 = vector.shape_cast %75 : vector<32xf32> to vector<32x1xf32>
    %77 = tpu.concatenate %73, %76 in 1 : vector<32x1xf32>, vector<32x1xf32> -> vector<32x2xf32>
    %c0_19 = arith.constant 0 : index
    %c0_20 = arith.constant 0 : index
    %c0_21 = arith.constant 0 : index
    %78 = vector.load %arg7[%c0_19, %c0_20, %c0_21] : memref<1x32x2xf32, #tpu.memory_space<vmem>>, vector<1x32x2xf32>
    %79 = vector.shape_cast %78 : vector<1x32x2xf32> to vector<32x2xf32>
    %80 = vector.shape_cast %77 : vector<32x2xf32> to vector<1x32x2xf32>
    tpu.vector_store %arg7[%c0_19, %c0_20, %c0_21], %80 {strides = array<i32>} : memref<1x32x2xf32, #tpu.memory_space<vmem>>, vector<1x32x2xf32>,
    return
  }
  func.func @transform_0(%arg0: i32) -> (i32, i32, i32) {
    %c0_i32 = arith.constant 0 : i32
    %c0_i32_0 = arith.constant 0 : i32
    %c0_i32_1 = arith.constant 0 : i32
    return %arg0, %c0_i32, %c0_i32_0 : i32, i32, i32
  }
  func.func @transform_1(%arg0: i32) -> (i32, i32) {
    %c0_i32 = arith.constant 0 : i32
    %c0_i32_0 = arith.constant 0 : i32
    %c0_i32_1 = arith.constant 0 : i32
    return %c0_i32, %c0_i32_0 : i32, i32
  }
  func.func @transform_2(%arg0: i32) -> (i32, i32) {
    %c0_i32 = arith.constant 0 : i32
    %c0_i32_0 = arith.constant 0 : i32
    %c0_i32_1 = arith.constant 0 : i32
    return %c0_i32, %c0_i32_0 : i32, i32
  }
  func.func @transform_3(%arg0: i32) -> (i32, i32) {
    %c0_i32 = arith.constant 0 : i32
    %c0_i32_0 = arith.constant 0 : i32
    %c0_i32_1 = arith.constant 0 : i32
    return %c0_i32, %c0_i32_0 : i32, i32
  }
  func.func @transform_4(%arg0: i32) -> (i32, i32) {
    %c0_i32 = arith.constant 0 : i32
    %c0_i32_0 = arith.constant 0 : i32
    %c0_i32_1 = arith.constant 0 : i32
    return %c0_i32, %c0_i32_0 : i32, i32
  }
  func.func @transform_5(%arg0: i32) -> (i32, i32, i32) {
    %c0_i32 = arith.constant 0 : i32
    %c0_i32_0 = arith.constant 0 : i32
    %c0_i32_1 = arith.constant 0 : i32
    return %arg0, %c0_i32, %c0_i32_0 : i32, i32, i32
  }
  func.func @transform_6(%arg0: i32) -> (i32, i32, i32) {
    %c0_i32 = arith.constant 0 : i32
    %c0_i32_0 = arith.constant 0 : i32
    %c0_i32_1 = arith.constant 0 : i32
    return %arg0, %c0_i32, %c0_i32_0 : i32, i32, i32
  }
}

module attributes {stable_mosaic.version = 11 : i64} {
  func.func @_final_kernel(%arg0: i32, %arg1: i32, %arg2: memref<1x32x256xbf16, #tpu.memory_space<vmem>>, %arg3: memref<1x32x256xf32, #tpu.memory_space<vmem>>, %arg4: memref<32x1xf32, #tpu.memory_space<vmem>>, %arg5: memref<32x1xf32, #tpu.memory_space<vmem>>, %arg6: memref<1x32x256xf32, #tpu.memory_space<vmem>>) attributes {dimension_semantics = [#tpu.dimension_semantics<parallel>, #tpu.dimension_semantics<parallel>], iteration_bounds = array<i64: 2, 1>, scalar_prefetch = 0 : i64, scratch_operands = 0 : i64, tpu.core_type = #tpu.core_type<tc>, window_params = [{transform_indices = @transform_0, window_bounds = array<i64: 1, 32, 256>}, {transform_indices = @transform_1, window_bounds = array<i64: 1, 32, 256>}, {pipeline_mode = #tpu.pipeline_mode<synchronous>, transform_indices = @transform_2, window_bounds = array<i64: 32, 1>}, {pipeline_mode = #tpu.pipeline_mode<synchronous>, transform_indices = @transform_3, window_bounds = array<i64: 32, 1>}, {transform_indices = @transform_4, window_bounds = array<i64: 1, 32, 256>}]} {
    %c0 = arith.constant 0 : index
    %c0_0 = arith.constant 0 : index
    %c0_1 = arith.constant 0 : index
    %0 = vector.load %arg2[%c0, %c0_0, %c0_1] : memref<1x32x256xbf16, #tpu.memory_space<vmem>>, vector<1x32x256xbf16>
    %1 = vector.shape_cast %0 : vector<1x32x256xbf16> to vector<32x256xbf16>
    %2 = arith.extf %1 : vector<32x256xbf16> to vector<32x256xf32>
    %c0_2 = arith.constant 0 : index
    %c0_3 = arith.constant 0 : index
    %3 = vector.load %arg4[%c0_2, %c0_3] : memref<32x1xf32, #tpu.memory_space<vmem>>, vector<32x1xf32>
    %4 = vector.broadcast %3 : vector<32x1xf32> to vector<32x256xf32>
    %5 = arith.mulf %2, %4 : vector<32x256xf32>
    %c0_4 = arith.constant 0 : index
    %c0_5 = arith.constant 0 : index
    %6 = vector.load %arg5[%c0_4, %c0_5] : memref<32x1xf32, #tpu.memory_space<vmem>>, vector<32x1xf32>
    %7 = vector.broadcast %6 : vector<32x1xf32> to vector<32x256xf32>
    %8 = arith.addf %5, %7 : vector<32x256xf32>
    %c0_6 = arith.constant 0 : index
    %c0_7 = arith.constant 0 : index
    %c0_8 = arith.constant 0 : index
    %9 = vector.load %arg3[%c0_6, %c0_7, %c0_8] : memref<1x32x256xf32, #tpu.memory_space<vmem>>, vector<1x32x256xf32>
    %10 = vector.shape_cast %9 : vector<1x32x256xf32> to vector<32x256xf32>
    %11 = arith.addf %8, %10 : vector<32x256xf32>
    %cst = arith.constant 0.000000e+00 : f32
    %12 = vector.broadcast %cst : f32 to vector<32x256xf32>
    %13 = arith.maximumf %11, %12 : vector<32x256xf32>
    %c0_9 = arith.constant 0 : index
    %c0_10 = arith.constant 0 : index
    %c0_11 = arith.constant 0 : index
    %14 = vector.load %arg6[%c0_9, %c0_10, %c0_11] : memref<1x32x256xf32, #tpu.memory_space<vmem>>, vector<1x32x256xf32>
    %15 = vector.shape_cast %14 : vector<1x32x256xf32> to vector<32x256xf32>
    %16 = vector.shape_cast %13 : vector<32x256xf32> to vector<1x32x256xf32>
    tpu.vector_store %arg6[%c0_9, %c0_10, %c0_11], %16 {strides = array<i32>} : memref<1x32x256xf32, #tpu.memory_space<vmem>>, vector<1x32x256xf32>,
    return
  }
  func.func @transform_0(%arg0: i32, %arg1: i32) -> (i32, i32, i32) {
    %c0_i32 = arith.constant 0 : i32
    %c0_i32_0 = arith.constant 0 : i32
    return %arg0, %c0_i32, %arg1 : i32, i32, i32
  }
  func.func @transform_1(%arg0: i32, %arg1: i32) -> (i32, i32, i32) {
    %c0_i32 = arith.constant 0 : i32
    %c0_i32_0 = arith.constant 0 : i32
    return %arg0, %c0_i32, %arg1 : i32, i32, i32
  }
  func.func @transform_2(%arg0: i32, %arg1: i32) -> (i32, i32) {
    %c0_i32 = arith.constant 0 : i32
    %c0_i32_0 = arith.constant 0 : i32
    %c0_i32_1 = arith.constant 0 : i32
    return %c0_i32, %c0_i32_0 : i32, i32
  }
  func.func @transform_3(%arg0: i32, %arg1: i32) -> (i32, i32) {
    %c0_i32 = arith.constant 0 : i32
    %c0_i32_0 = arith.constant 0 : i32
    %c0_i32_1 = arith.constant 0 : i32
    return %c0_i32, %c0_i32_0 : i32, i32
  }
  func.func @transform_4(%arg0: i32, %arg1: i32) -> (i32, i32, i32) {
    %c0_i32 = arith.constant 0 : i32
    %c0_i32_0 = arith.constant 0 : i32
    return %arg0, %c0_i32, %arg1 : i32, i32, i32
  }
}

</mosaic_0001>

<llo_original>
// kernel: bottleneckx_forward.6
$region0: #{bottleneckx_forward.6}
  #allocation0 [shape = 'u32[]', space=smem, size = 0x4, offset = 0x4, fixed_abs, tag = 'smem constant byte address 0x4 - core index']
  #allocation1 [shape = 'u32[144,128]{1,0:T(1,128)}', space=vmem, size = 0x12000, scoped, tag = 'internal scratch']
  %s0 = inlined_call_operand.vmem [shape: bf16[2,32,256], index: 0, kind: input, shape index: {}]
  %s1 = inlined_call_operand.vmem [shape: bf16[32,32], index: 1, kind: input, shape index: {}]
  %s2 = inlined_call_operand.vmem [shape: f32[32,1], index: 2, kind: input, shape index: {}]
  %s3 = inlined_call_operand.vmem [shape: f32[32,1], index: 3, kind: input, shape index: {}]
  %s4 = inlined_call_operand.vmem [shape: bf16[2,32,256], index: 4, kind: output, shape index: {0}]
  %s5 = inlined_call_operand.vmem [shape: f32[2,1,32,2], index: 5, kind: output, shape index: {1}]
  %6 = xla_tuple %s4, %s5
  %s7 = sld [smem:[#allocation0]]
  $region57: #{bottleneckx_forward.6} parent=0
    _
  %s9 = ssub.s32 1, %s7
  %s10 = scalar_select 0, %s9, %s7
  loop: start=0, step=1, limit=4
  $region2: #{bottleneckx_forward.6} parent=0 // loop_pre_header
    _
  $region3: #{bottleneckx_forward.6} parent=0 // loop_header
    %s12 = sphi 0, %s16
    %p13 = scmp.ge.s32.totalorder %s12, 4
    %s19 = sphi 0, %s31
    %s20 = sphi 0, %s27
    %s21 = sphi 0, %s19
    %s22 = sphi 0, %s20
    %s23 = sphi 0, %s21
    %s24 = sphi 0, %s22
    %s36 = sphi 0, %s38
    %s39 = sphi 0, %s36
    %s40 = sphi 0, %s39
    %s56 = sphi 0, %s40
    %s60 = sphi 0, %s60
    %s62 = sphi 0, %s60
    %s63 = sphi 0, %s62
    %s77 = sphi 0, %s63
    %s81 = sphi 0, %s81
    %s83 = sphi 0, %s81
    %s84 = sphi 0, %s83
    %s98 = sphi 0, %s84
    %s102 = sphi 0, %s102
    %s104 = sphi 0, %s102
    %s105 = sphi 0, %s104
    %s119 = sphi 0, %s105
    %s127 = sphi 0, %s129
    %s130 = sphi 0, %s127
    %s131 = sphi 0, %s130
    %s147 = sphi 0, %s131
    %s155 = sphi 0, %s157
    %s158 = sphi 0, %s155
    %s159 = sphi 0, %s158
    %s175 = sphi 0, %s159
  $region4: #{bottleneckx_forward.6} parent=0 // loop_header_branch
    %15 = sbr.rel (%p13) target = $region8
  $region5: #{bottleneckx_forward.6} parent=0 // loop_body
    %s17 = ssub.s32 %s12, 1
    %s18 = ssub.s32 %s12, 2
    %s25 = sadd.s32 1, %s20
    %p26 = scmp.ge.s32.totalorder %s25, 1
    %s27 = scalar_select %p26, 0, %s25
    %s28 = sadd.s32 1, %s19
    %s29 = scalar_select %p26, %s28, %s19
    %p30 = scmp.ge.s32.totalorder %s29, 2
    %s31 = scalar_select %p30, 0, %s29
    %s32 = ssub.s32 %s19, %s31
    %s33 = ssub.s32 %s20, %s27
    %s34 = sor.u32 %s32, %s33
    %p35 = scmp.eq.s32.totalorder %s34, 0
    %s37 = sadd.s32 %s36, 1
    %s38 = scalar_select %p35, %s36, %s37
    %p41 = pneg %p35
    %p42 = scmp.eq.s32.totalorder %s12, 1
    %p43 = por %p41, %p42
    %p44 = scmp.ne.s32.totalorder %s36, %s39
    %p45 = scmp.eq.s32.totalorder %s12, 0
    %p46 = por %p44, %p45
    %p47 = scmp.ne.s32.totalorder %s36, %s39
    %p48 = scmp.eq.s32.totalorder %s17, 1
    %p49 = por %p47, %p48
    %p50 = scmp.ne.s32.totalorder %s39, %s40
    %p51 = scmp.eq.s32.totalorder %s17, 0
    %p52 = por %p50, %p51
    %p53 = scmp.ne.s32.totalorder %s39, %s40
    %p54 = scmp.eq.s32.totalorder %s18, 1
    %p55 = por %p53, %p54
    %p57 = scmp.ne.s32.totalorder %s40, %s56
    %p58 = scmp.eq.s32.totalorder %s18, 0
    %p59 = por %p57, %p58
    %s61 = sadd.s32 %s60, 1
    %p64 = scmp.eq.s32.totalorder %s12, 1
    %p65 = scmp.ne.s32.totalorder %s60, %s62
    %p66 = scmp.eq.s32.totalorder %s12, 0
    %p67 = por %p65, %p66
    %p68 = scmp.ne.s32.totalorder %s60, %s62
    %p69 = scmp.eq.s32.totalorder %s17, 1
    %p70 = por %p68, %p69
    %p71 = scmp.ne.s32.totalorder %s62, %s63
    %p72 = scmp.eq.s32.totalorder %s17, 0
    %p73 = por %p71, %p72
    %p74 = scmp.ne.s32.totalorder %s62, %s63
    %p75 = scmp.eq.s32.totalorder %s18, 1
    %p76 = por %p74, %p75
    %p78 = scmp.ne.s32.totalorder %s63, %s77
    %p79 = scmp.eq.s32.totalorder %s18, 0
    %p80 = por %p78, %p79
    %s82 = sadd.s32 %s81, 1
    %p85 = scmp.eq.s32.totalorder %s12, 1
    %p86 = scmp.ne.s32.totalorder %s81, %s83
    %p87 = scmp.eq.s32.totalorder %s12, 0
    %p88 = por %p86, %p87
    %p89 = scmp.ne.s32.totalorder %s81, %s83
    %p90 = scmp.eq.s32.totalorder %s17, 1
    %p91 = por %p89, %p90
    %p92 = scmp.ne.s32.totalorder %s83, %s84
    %p93 = scmp.eq.s32.totalorder %s17, 0
    %p94 = por %p92, %p93
    %p95 = scmp.ne.s32.totalorder %s83, %s84
    %p96 = scmp.eq.s32.totalorder %s18, 1
    %p97 = por %p95, %p96
    %p99 = scmp.ne.s32.totalorder %s84, %s98
    %p100 = scmp.eq.s32.totalorder %s18, 0
    %p101 = por %p99, %p100
    %s103 = sadd.s32 %s102, 1
    %p106 = scmp.eq.s32.totalorder %s12, 1
    %p107 = scmp.ne.s32.totalorder %s102, %s104
    %p108 = scmp.eq.s32.totalorder %s12, 0
    %p109 = por %p107, %p108
    %p110 = scmp.ne.s32.totalorder %s102, %s104
    %p111 = scmp.eq.s32.totalorder %s17, 1
    %p112 = por %p110, %p111
    %p113 = scmp.ne.s32.totalorder %s104, %s105
    %p114 = scmp.eq.s32.totalorder %s17, 0
    %p115 = por %p113, %p114
    %p116 = scmp.ne.s32.totalorder %s104, %s105
    %p117 = scmp.eq.s32.totalorder %s18, 1
    %p118 = por %p116, %p117
    %p120 = scmp.ne.s32.totalorder %s105, %s119
    %p121 = scmp.eq.s32.totalorder %s18, 0
    %p122 = por %p120, %p121
    %s123 = ssub.s32 %s19, %s31
    %s124 = ssub.s32 %s20, %s27
    %s125 = sor.u32 %s123, %s124
    %p126 = scmp.eq.s32.totalorder %s125, 0
    %s128 = sadd.s32 %s127, 1
    %s129 = scalar_select %p126, %s127, %s128
    %p132 = pneg %p126
    %p133 = scmp.eq.s32.totalorder %s12, 1
    %p134 = por %p132, %p133
    %p135 = scmp.ne.s32.totalorder %s127, %s130
    %p136 = scmp.eq.s32.totalorder %s12, 0
    %p137 = por %p135, %p136
    %p138 = scmp.ne.s32.totalorder %s127, %s130
    %p139 = scmp.eq.s32.totalorder %s17, 1
    %p140 = por %p138, %p139
    %p141 = scmp.ne.s32.totalorder %s130, %s131
    %p142 = scmp.eq.s32.totalorder %s17, 0
    %p143 = por %p141, %p142
    %p144 = scmp.ne.s32.totalorder %s130, %s131
    %p145 = scmp.eq.s32.totalorder %s18, 1
    %p146 = por %p144, %p145
    %p148 = scmp.ne.s32.totalorder %s131, %s147
    %p149 = scmp.eq.s32.totalorder %s18, 0
    %p150 = por %p148, %p149
    %s151 = ssub.s32 %s19, %s31
    %s152 = ssub.s32 %s20, %s27
    %s153 = sor.u32 %s151, %s152
    %p154 = scmp.eq.s32.totalorder %s153, 0
    %s156 = sadd.s32 %s155, 1
    %s157 = scalar_select %p154, %s155, %s156
    %p160 = pneg %p154
    %p161 = scmp.eq.s32.totalorder %s12, 1
    %p162 = por %p160, %p161
    %p163 = scmp.ne.s32.totalorder %s155, %s158
    %p164 = scmp.eq.s32.totalorder %s12, 0
    %p165 = por %p163, %p164
    %p166 = scmp.ne.s32.totalorder %s155, %s158
    %p167 = scmp.eq.s32.totalorder %s17, 1
    %p168 = por %p166, %p167
    %p169 = scmp.ne.s32.totalorder %s158, %s159
    %p170 = scmp.eq.s32.totalorder %s17, 0
    %p171 = por %p169, %p170
    %p172 = scmp.ne.s32.totalorder %s158, %s159
    %p173 = scmp.eq.s32.totalorder %s18, 1
    %p174 = por %p172, %p173
    %p176 = scmp.ne.s32.totalorder %s159, %s175
    %p177 = scmp.eq.s32.totalorder %s18, 0
    %p178 = por %p176, %p177
    %p179 = scmp.le.s32.totalorder 1, %s12
    %p180 = scmp.lt.s32.totalorder %s12, 3
    %p181 = pnand %p179, %p180
    %p182 = pneg %p181
    // Predicated region
    $region9: #{bottleneckx_forward.6} parent=5 // pred_check
      _
    $region10: #{bottleneckx_forward.6} parent=5 // pred_check_branch
      %184 = sbr.rel (%p181) target = $region12
    $region11: #{bottleneckx_forward.6} parent=5 // pred_region
      %s185 = ssub.s32 %s12, 1
      // Predicated region
      $region13: #{bottleneckx_forward.6} parent=11 // pred_check
        %p186 = pneg %p73
      $region14: #{bottleneckx_forward.6} parent=11 // pred_check_branch
        %188 = sbr.rel (%p186) target = $region16
      $region15: #{bottleneckx_forward.6} parent=11 // pred_region
        _
      $region16: #{bottleneckx_forward.6} parent=11 // pred_fallthru
        _
      // Predicated region
      $region17: #{bottleneckx_forward.6} parent=11 // pred_check
        %p189 = pneg %p94
      $region18: #{bottleneckx_forward.6} parent=11 // pred_check_branch
        %191 = sbr.rel (%p189) target = $region20
      $region19: #{bottleneckx_forward.6} parent=11 // pred_region
        _
      $region20: #{bottleneckx_forward.6} parent=11 // pred_fallthru
        _
      // Predicated region
      $region21: #{bottleneckx_forward.6} parent=11 // pred_check
        %p192 = pneg %p115
      $region22: #{bottleneckx_forward.6} parent=11 // pred_check_branch
        %194 = sbr.rel (%p192) target = $region24
      $region23: #{bottleneckx_forward.6} parent=11 // pred_region
        _
      $region24: #{bottleneckx_forward.6} parent=11 // pred_fallthru
        _
    $region12: #{bottleneckx_forward.6} parent=5 // pred_fallthru
      _
    %p195 = scmp.lt.s32.totalorder %s12, 2
    // Predicated region
    $region25: #{bottleneckx_forward.6} parent=5 // pred_check
      %p196 = pneg %p195
    $region26: #{bottleneckx_forward.6} parent=5 // pred_check_branch
      %198 = sbr.rel (%p196) target = $region28
    $region27: #{bottleneckx_forward.6} parent=5 // pred_region
      // Predicated region
      $region29: #{bottleneckx_forward.6} parent=27 // pred_check
        %p199 = pneg %p46
      $region30: #{bottleneckx_forward.6} parent=27 // pred_check_branch
        %201 = sbr.rel (%p199) target = $region32
      $region31: #{bottleneckx_forward.6} parent=27 // pred_region
        %s202 = smul.u32 2, %s20
        %p203 = scmp.lt.s32.totalorder %s19, 1
        %s204 = scalar_select %p203, %s19, 1
        %p205 = scmp.lt.s32.totalorder %s202, 1
        %s206 = scalar_select %p205, %s202, 1
        %s207 = smul.addr %s204, 8
        %s208 = sadd.s32 %s206, %s207
        %s209 = smul.addr %s208, 4
        %s210 = scalar_lea.vmem %s0, %s209
        %s211 = smul.u32 2, %s20
      $region32: #{bottleneckx_forward.6} parent=27 // pred_fallthru
        _
    $region28: #{bottleneckx_forward.6} parent=5 // pred_fallthru
      _
    %p212 = scmp.le.s32.totalorder 1, %s12
    %p213 = scmp.lt.s32.totalorder %s12, 3
    %p214 = pnand %p212, %p213
    %p215 = pneg %p214
    // Predicated region
    $region33: #{bottleneckx_forward.6} parent=5 // pred_check
      _
    $region34: #{bottleneckx_forward.6} parent=5 // pred_check_branch
      %217 = sbr.rel (%p214) target = $region36
    $region35: #{bottleneckx_forward.6} parent=5 // pred_region
      %s218 = ssub.s32 %s12, 1
      %s219 = smul.u32 2, %s22
      %p220 = scmp.lt.s32.totalorder %s21, 1
      %s221 = scalar_select %p220, %s21, 1
      %p222 = scmp.lt.s32.totalorder %s219, 1
      %s223 = scalar_select %p222, %s219, 1
      %s224 = smul.addr %s221, 8
      %s225 = sadd.s32 %s223, %s224
      %s226 = smul.addr %s225, 4
      %s227 = scalar_lea.vmem %s0, %s226
      %p228 = pneg %p52
      %p229 = pneg %p49
      %p230 = pneg %p73
      %p231 = pneg %p70
      %p232 = pneg %p94
      %p233 = pneg %p91
      %p234 = pneg %p115
      %p235 = pneg %p112
      %p236 = pneg %p143
      %p237 = pneg %p140
      %s238 = smul.u32 2, %s22
      %p239 = scmp.lt.s32.totalorder %s21, 1
      %s240 = scalar_select %p239, %s21, 1
      %p241 = scmp.lt.s32.totalorder %s238, 1
      %s242 = scalar_select %p241, %s238, 1
      %s243 = smul.addr %s240, 8
      %s244 = sadd.s32 %s242, %s243
      %s245 = smul.addr %s244, 4
      %s246 = scalar_lea.vmem %s4, %s245
      %p247 = pneg %p171
      %p248 = pneg %p168
      %p249 = scmp.lt.s32.totalorder %s21, 1
      %s250 = scalar_select %p249, %s21, 1
      %p251 = scmp.lt.s32.totalorder %s22, 0
      %s252 = scalar_select %p251, %s22, 0
      %s253 = smul.addr %s252, 4
      %s254 = smul.addr %s250, 4
      %s255 = sadd.s32 %s253, %s254
      %s256 = smul.addr %s255, 8
      %s257 = scalar_lea.vmem %s5, %s256
      %s258 = smul.u32 2, %s22
      %p259 = scmp.lt.s32.totalorder %s21, 1
      %s260 = scalar_select %p259, %s21, 1
      %p261 = scmp.lt.s32.totalorder %s258, 1
      %s262 = scalar_select %p261, %s258, 1
      %s263 = smul.addr %s260, 8
      %s264 = sadd.s32 %s262, %s263
      %s265 = smul.addr %s264, 4
      %s266 = scalar_lea.vmem %s0, %s265
      %s267 = smul.u32 2, %s22
      %s268 = smul.u32 2, %s22
      %p269 = scmp.lt.s32.totalorder %s21, 1
      %s270 = scalar_select %p269, %s21, 1
      %p271 = scmp.lt.s32.totalorder %s268, 1
      %s272 = scalar_select %p271, %s268, 1
      %s273 = smul.addr %s270, 8
      %s274 = sadd.s32 %s272, %s273
      %s275 = smul.addr %s274, 4
      %s276 = scalar_lea.vmem %s4, %s275
      %s277 = smul.u32 2, %s22
      %p278 = scmp.lt.s32.totalorder %s21, 1
      %s279 = scalar_select %p278, %s21, 1
      %p280 = scmp.lt.s32.totalorder %s22, 0
      %s281 = scalar_select %p280, %s22, 0
      %s282 = smul.addr %s281, 4
      %s283 = smul.addr %s279, 4
      %s284 = sadd.s32 %s282, %s283
      %s285 = smul.addr %s284, 8
      %s286 = scalar_lea.vmem %s5, %s285
      %v288 = vld [vmem:[%s266] sm:$0xff]
      %v289 = vld [vmem:[%s266 + $0x8] sm:$0xff]
      %v290 = vld [vmem:[%s266 + $0x10] sm:$0xff]
      %v291 = vld [vmem:[%s266 + $0x18] sm:$0xff]
      %v292 = vunpack.c.l.bf16 %v288
      %v293 = vunpack.c.h.bf16 %v288
      %v294 = vunpack.c.l.bf16 %v289
      %v295 = vunpack.c.h.bf16 %v289
      %v296 = vunpack.c.l.bf16 %v290
      %v297 = vunpack.c.h.bf16 %v290
      %v298 = vunpack.c.l.bf16 %v291
      %v299 = vunpack.c.h.bf16 %v291
      %v300 = vld [vmem:[%s2] sm:$0xff]
      %v301 = vld [vmem:[%s2 + $0x8] sm:$0xff]
      %v302 = vld [vmem:[%s2 + $0x10] sm:$0xff]
      %v303 = vld [vmem:[%s2 + $0x18] sm:$0xff]
      %305 = vset.pattern.permute.xlu0 0
      %306 = vperm.xlu0 %305, %v300
      %v307 = vpop.permute.xlu0 %306
      %310 = vset.pattern.permute.xlu0 0
      %311 = vperm.xlu0 %310, %v301
      %v312 = vpop.permute.xlu0 %311
      %315 = vset.pattern.permute.xlu0 0
      %316 = vperm.xlu0 %315, %v302
      %v317 = vpop.permute.xlu0 %316
      %320 = vset.pattern.permute.xlu0 0
      %321 = vperm.xlu0 %320, %v303
      %v322 = vpop.permute.xlu0 %321
      %v324 = vmul.f32 %v292, %v307
      %v325 = vmul.f32 %v293, %v307
      %v326 = vmul.f32 %v294, %v312
      %v327 = vmul.f32 %v295, %v312
      %v328 = vmul.f32 %v296, %v317
      %v329 = vmul.f32 %v297, %v317
      %v330 = vmul.f32 %v298, %v322
      %v331 = vmul.f32 %v299, %v322
      %v332 = vld [vmem:[%s3] sm:$0xff]
      %v333 = vld [vmem:[%s3 + $0x8] sm:$0xff]
      %v334 = vld [vmem:[%s3 + $0x10] sm:$0xff]
      %v335 = vld [vmem:[%s3 + $0x18] sm:$0xff]
      %337 = vset.pattern.permute.xlu0 0
      %338 = vperm.xlu0 %337, %v332
      %v339 = vpop.permute.xlu0 %338
      %342 = vset.pattern.permute.xlu0 0
      %343 = vperm.xlu0 %342, %v333
      %v344 = vpop.permute.xlu0 %343
      %347 = vset.pattern.permute.xlu0 0
      %348 = vperm.xlu0 %347, %v334
      %v349 = vpop.permute.xlu0 %348
      %352 = vset.pattern.permute.xlu0 0
      %353 = vperm.xlu0 %352, %v335
      %v354 = vpop.permute.xlu0 %353
      %v356 = vadd.f32 %v324, %v339
      %v357 = vadd.f32 %v325, %v339
      %v358 = vadd.f32 %v326, %v344
      %v359 = vadd.f32 %v327, %v344
      %v360 = vadd.f32 %v328, %v349
      %v361 = vadd.f32 %v329, %v349
      %v362 = vadd.f32 %v330, %v354
      %v363 = vadd.f32 %v331, %v354
      %v364 = vmax.f32 %v356, 0.0
      %v365 = vmax.f32 %v357, 0.0
      %v366 = vmax.f32 %v358, 0.0
      %v367 = vmax.f32 %v359, 0.0
      %v368 = vmax.f32 %v360, 0.0
      %v369 = vmax.f32 %v361, 0.0
      %v370 = vmax.f32 %v362, 0.0
      %v371 = vmax.f32 %v363, 0.0
      %v372 = vld [vmem:[%s1] sm:$0xf]
      %v373 = vld [vmem:[%s1 + $0x4] sm:$0xf]
      %v374 = vld [vmem:[%s1 + $0x8] sm:$0xf]
      %v375 = vld [vmem:[%s1 + $0xc] sm:$0xf]
      %v376 = vpack.c.bf16 %v366, %v364
      %v377 = vpack.c.bf16 %v367, %v365
      %v378 = vpack.c.bf16 %v370, %v368
      %v379 = vpack.c.bf16 %v371, %v369
      %v384 = vunpack.c.l.b16 %v372
      %v385 = vunpack.c.l.b16 %v373
      %v386 = vunpack.c.l.b16 %v374
      %v387 = vunpack.c.l.b16 %v375
      %v388 = vpack.c.b16 %v385, %v384
      %v389 = vpack.c.b16 %v387, %v386
      %vm390 = vcmask 261120
      %v392 = vsel %vm390, %v388, 0
      %v395 = vsel %vm390, %v389, 0
      %397 = vmatprep.subr.bf16.mxu0 %v377
      %398 = vmatpush1.bf16.msra.mxu0 %v376
      %399 = vmatprep.subr.bf16.mxu0 %v379
      %400 = vmatpush1.bf16.msra.mxu0 %v378
      %401 = vmatprep.subr.bf16.mxu0 0
      %402 = vmatpush1.bf16.msra.mxu0 0
      %403 = vmatprep.subr.bf16.mxu0 0
      %404 = vmatpush1.bf16.msra.mxu0 0
      %405 = vmatprep.subr.bf16.mxu0 0
      %406 = vmatpush1.bf16.msra.mxu0 0
      %407 = vmatprep.subr.bf16.mxu0 0
      %408 = vmatpush1.bf16.msra.mxu0 0
      %409 = vmatprep.subr.bf16.mxu0 0
      %410 = vmatpush1.bf16.msra.mxu0 0
      %411 = vmatprep.subr.bf16.mxu0 0
      %412 = vmatpush1.bf16.msra.mxu0 0
      %413 = vmatprep.subr.bf16.mxu0 0
      %414 = vmatpush1.bf16.msra.mxu0 0
      %415 = vmatprep.subr.bf16.mxu0 0
      %416 = vmatpush1.bf16.msra.mxu0 0
      %417 = vmatprep.subr.bf16.mxu0 0
      %418 = vmatpush1.bf16.msra.mxu0 0
      %419 = vmatprep.subr.bf16.mxu0 0
      %420 = vmatpush1.bf16.msra.mxu0 0
      %421 = vmatprep.subr.bf16.mxu0 0
      %422 = vmatpush1.bf16.msra.mxu0 0
      %423 = vmatprep.subr.bf16.mxu0 0
      %424 = vmatpush1.bf16.msra.mxu0 0
      %425 = vmatprep.subr.bf16.mxu0 0
      %426 = vmatpush1.bf16.msra.mxu0 0
      %427 = vmatprep.subr.bf16.mxu0 0
      %428 = vmatpush1.bf16.msra.mxu0 0
      %429 = vmatprep.mubr.bf16.mxu0 0
      %430 = vmatmul.mubr.bf16.gmra.mrb[0].mxu0 %v392
      %v431 = vpop.f32.mrb[0].mxu0
      %v432 = vadd.f32 0.0, %v431
      %v433 = vpop.f32.mrb[0].mxu0
      %v434 = vadd.f32 0.0, %v433
      %v435 = vpop.f32.mrb[0].mxu0
      %v436 = vadd.f32 0.0, %v435
      %v437 = vpop.f32.mrb[0].mxu0
      %v438 = vadd.f32 0.0, %v437
      %439 = vmatprep.mubr.bf16.mxu0 0
      %440 = vmatmul.mubr.bf16.gmra.mrb[0].mxu0 %v395
      %v441 = vpop.f32.mrb[0].mxu0
      %v442 = vadd.f32 0.0, %v441
      %v443 = vpop.f32.mrb[0].mxu0
      %v444 = vadd.f32 0.0, %v443
      %v445 = vpop.f32.mrb[0].mxu0
      %v446 = vadd.f32 0.0, %v445
      %v447 = vpop.f32.mrb[0].mxu0
      %v448 = vadd.f32 0.0, %v447
      %449 = vdwg.mxu0
      %v450 = vpack.c.bf16 %v436, %v432
      %v451 = vpack.c.bf16 %v438, %v434
      %v452 = vpack.c.bf16 %v446, %v442
      %v453 = vpack.c.bf16 %v448, %v444
      %v458 = vunpack.c.l.b16 %v450
      %v459 = vunpack.c.l.b16 %v451
      %v460 = vunpack.c.h.b16 %v450
      %v461 = vunpack.c.h.b16 %v451
      %v462 = vunpack.c.l.b16 %v452
      %v463 = vunpack.c.l.b16 %v453
      %v464 = vunpack.c.h.b16 %v452
      %v465 = vunpack.c.h.b16 %v453
      %v466 = vpack.c.b16 %v459, %v458
      %v467 = vpack.c.b16 %v461, %v460
      %v468 = vpack.c.b16 %v463, %v462
      %v469 = vpack.c.b16 %v465, %v464
      %474 = vst [vmem:[%s276] sm:$0xff] %v466
      %475 = vst [vmem:[%s276 + $0x8] sm:$0xff] %v467
      %476 = vst [vmem:[%s276 + $0x10] sm:$0xff] %v468
      %477 = vst [vmem:[%s276 + $0x18] sm:$0xff] %v469
      %v478 = vadd.f32 %v432, %v434
      %479 = vadd.xlane.f32.xlu0 %v478
      %v480 = vpop.xlane.xlu0 %479
      %v481 = vadd.f32 %v436, %v438
      %482 = vadd.xlane.f32.xlu0 %v481
      %v483 = vpop.xlane.xlu0 %482
      %v484 = vadd.f32 %v442, %v444
      %485 = vadd.xlane.f32.xlu0 %v484
      %v486 = vpop.xlane.xlu0 %485
      %v487 = vadd.f32 %v446, %v448
      %488 = vadd.xlane.f32.xlu0 %v487
      %v489 = vpop.xlane.xlu0 %488
      %v490 = vmul.f32 %v432, %v432
      %v491 = vmul.f32 %v434, %v434
      %v492 = vmul.f32 %v436, %v436
      %v493 = vmul.f32 %v438, %v438
      %v494 = vmul.f32 %v442, %v442
      %v495 = vmul.f32 %v444, %v444
      %v496 = vmul.f32 %v446, %v446
      %v497 = vmul.f32 %v448, %v448
      %v498 = vadd.f32 %v490, %v491
      %499 = vadd.xlane.f32.xlu0 %v498
      %v500 = vpop.xlane.xlu0 %499
      %v501 = vadd.f32 %v492, %v493
      %502 = vadd.xlane.f32.xlu0 %v501
      %v503 = vpop.xlane.xlu0 %502
      %v504 = vadd.f32 %v494, %v495
      %505 = vadd.xlane.f32.xlu0 %v504
      %v506 = vpop.xlane.xlu0 %505
      %v507 = vadd.f32 %v496, %v497
      %508 = vadd.xlane.f32.xlu0 %v507
      %v509 = vpop.xlane.xlu0 %508
      %vm510 = vcmask 7168
      %v511 = vsel %vm510, %v480, %v500
      %v512 = vsel %vm510, %v483, %v503
      %v513 = vsel %vm510, %v486, %v506
      %v514 = vsel %vm510, %v489, %v509
      %vm515 = vcmask 15360
      %516 = vst.msk [vmem:[%s286] sm:$0xff] %vm515, %v511
      %517 = vst.msk [vmem:[%s286 + $0x8] sm:$0xff] %vm515, %v512
      %518 = vst.msk [vmem:[%s286 + $0x10] sm:$0xff] %vm515, %v513
      %519 = vst.msk [vmem:[%s286 + $0x18] sm:$0xff] %vm515, %v514
      %s520 = smul.u32 2, %s22
      %p521 = scmp.lt.s32.totalorder %s21, 1
      %s522 = scalar_select %p521, %s21, 1
      %p523 = scmp.lt.s32.totalorder %s520, 1
      %s524 = scalar_select %p523, %s520, 1
      %s525 = smul.addr %s522, 8
      %s526 = sadd.s32 %s524, %s525
      %s527 = smul.addr %s526, 4
      %s528 = scalar_lea.vmem %s4, %s527
      %p529 = scmp.lt.s32.totalorder %s21, 1
      %s530 = scalar_select %p529, %s21, 1
      %p531 = scmp.lt.s32.totalorder %s22, 0
      %s532 = scalar_select %p531, %s22, 0
      %s533 = smul.addr %s532, 4
      %s534 = smul.addr %s530, 4
      %s535 = sadd.s32 %s533, %s534
      %s536 = smul.addr %s535, 8
      %s537 = scalar_lea.vmem %s5, %s536
      // Predicated region
      $region37: #{bottleneckx_forward.6} parent=35 // pred_check
        %p538 = pneg %p140
      $region38: #{bottleneckx_forward.6} parent=35 // pred_check_branch
        %540 = sbr.rel (%p538) target = $region40
      $region39: #{bottleneckx_forward.6} parent=35 // pred_region
        %s541 = smul.u32 2, %s22
      $region40: #{bottleneckx_forward.6} parent=35 // pred_fallthru
        _
      // Predicated region
      $region41: #{bottleneckx_forward.6} parent=35 // pred_check
        %p542 = pneg %p168
      $region42: #{bottleneckx_forward.6} parent=35 // pred_check_branch
        %544 = sbr.rel (%p542) target = $region44
      $region43: #{bottleneckx_forward.6} parent=35 // pred_region
        _
      $region44: #{bottleneckx_forward.6} parent=35 // pred_fallthru
        _
    $region36: #{bottleneckx_forward.6} parent=5 // pred_fallthru
      _
    %p545 = scmp.le.s32.totalorder 2, %s12
    // Predicated region
    $region45: #{bottleneckx_forward.6} parent=5 // pred_check
      %p546 = pneg %p545
    $region46: #{bottleneckx_forward.6} parent=5 // pred_check_branch
      %548 = sbr.rel (%p546) target = $region48
    $region47: #{bottleneckx_forward.6} parent=5 // pred_region
      %s549 = ssub.s32 %s12, 2
      // Predicated region
      $region49: #{bottleneckx_forward.6} parent=47 // pred_check
        %p550 = pneg %p146
      $region50: #{bottleneckx_forward.6} parent=47 // pred_check_branch
        %552 = sbr.rel (%p550) target = $region52
      $region51: #{bottleneckx_forward.6} parent=47 // pred_region
        %s553 = smul.u32 2, %s24
        %p554 = scmp.lt.s32.totalorder %s23, 1
        %s555 = scalar_select %p554, %s23, 1
        %p556 = scmp.lt.s32.totalorder %s553, 1
        %s557 = scalar_select %p556, %s553, 1
        %s558 = smul.addr %s555, 8
        %s559 = sadd.s32 %s557, %s558
        %s560 = smul.addr %s559, 4
        %s561 = scalar_lea.vmem %s4, %s560
      $region52: #{bottleneckx_forward.6} parent=47 // pred_fallthru
        _
      // Predicated region
      $region53: #{bottleneckx_forward.6} parent=47 // pred_check
        %p562 = pneg %p174
      $region54: #{bottleneckx_forward.6} parent=47 // pred_check_branch
        %564 = sbr.rel (%p562) target = $region56
      $region55: #{bottleneckx_forward.6} parent=47 // pred_region
        %p565 = scmp.lt.s32.totalorder %s23, 1
        %s566 = scalar_select %p565, %s23, 1
        %p567 = scmp.lt.s32.totalorder %s24, 0
        %s568 = scalar_select %p567, %s24, 0
        %s569 = smul.addr %s568, 4
        %s570 = smul.addr %s566, 4
        %s571 = sadd.s32 %s569, %s570
        %s572 = smul.addr %s571, 8
        %s573 = scalar_lea.vmem %s5, %s572
      $region56: #{bottleneckx_forward.6} parent=47 // pred_fallthru
        _
    $region48: #{bottleneckx_forward.6} parent=5 // pred_fallthru
      _
  $region6: #{bottleneckx_forward.6} parent=0 // loop_footer
    %s16 = sadd.s32 1, %s12
  $region7: #{bottleneckx_forward.6} parent=0 // loop_footer_branch
    %11 = sbr.rel target = $region3
  $region8: #{bottleneckx_forward.6} parent=0 // loop_exit
    _

// kernel: bottleneckx_forward.4
$region0: #{bottleneckx_forward.4}
  #allocation0 [shape = 'u32[]', space=smem, size = 0x4, offset = 0x4, fixed_abs, tag = 'smem constant byte address 0x4 - core index']
  #allocation1 [shape = 'u32[144,128]{1,0:T(1,128)}', space=vmem, size = 0x12000, scoped, tag = 'internal scratch']
  %s0 = inlined_call_operand.vmem [shape: f32[2,32,256], index: 0, kind: input, shape index: {}]
  %s1 = inlined_call_operand.vmem [shape: bf16[32,32], index: 1, kind: input, shape index: {}]
  %s2 = inlined_call_operand.vmem [shape: bf16[2,32,256], index: 2, kind: output, shape index: {0}]
  %s3 = inlined_call_operand.vmem [shape: f32[2,1,32,2], index: 3, kind: output, shape index: {1}]
  %4 = xla_tuple %s2, %s3
  %s5 = sld [smem:[#allocation0]]
  $region49: #{bottleneckx_forward.4} parent=0
    _
  %s7 = ssub.s32 1, %s5
  %s8 = scalar_select 0, %s7, %s5
  loop: start=0, step=1, limit=4
  $region2: #{bottleneckx_forward.4} parent=0 // loop_pre_header
    _
  $region3: #{bottleneckx_forward.4} parent=0 // loop_header
    %s10 = sphi 0, %s14
    %p11 = scmp.ge.s32.totalorder %s10, 4
    %s17 = sphi 0, %s29
    %s18 = sphi 0, %s25
    %s19 = sphi 0, %s17
    %s20 = sphi 0, %s18
    %s21 = sphi 0, %s19
    %s22 = sphi 0, %s20
    %s34 = sphi 0, %s36
    %s37 = sphi 0, %s34
    %s38 = sphi 0, %s37
    %s54 = sphi 0, %s38
    %s58 = sphi 0, %s58
    %s60 = sphi 0, %s58
    %s61 = sphi 0, %s60
    %s75 = sphi 0, %s61
    %s83 = sphi 0, %s85
    %s86 = sphi 0, %s83
    %s87 = sphi 0, %s86
    %s103 = sphi 0, %s87
    %s111 = sphi 0, %s113
    %s114 = sphi 0, %s111
    %s115 = sphi 0, %s114
    %s131 = sphi 0, %s115
  $region4: #{bottleneckx_forward.4} parent=0 // loop_header_branch
    %13 = sbr.rel (%p11) target = $region8
  $region5: #{bottleneckx_forward.4} parent=0 // loop_body
    %s15 = ssub.s32 %s10, 1
    %s16 = ssub.s32 %s10, 2
    %s23 = sadd.s32 1, %s18
    %p24 = scmp.ge.s32.totalorder %s23, 1
    %s25 = scalar_select %p24, 0, %s23
    %s26 = sadd.s32 1, %s17
    %s27 = scalar_select %p24, %s26, %s17
    %p28 = scmp.ge.s32.totalorder %s27, 2
    %s29 = scalar_select %p28, 0, %s27
    %s30 = ssub.s32 %s17, %s29
    %s31 = ssub.s32 %s18, %s25
    %s32 = sor.u32 %s30, %s31
    %p33 = scmp.eq.s32.totalorder %s32, 0
    %s35 = sadd.s32 %s34, 1
    %s36 = scalar_select %p33, %s34, %s35
    %p39 = pneg %p33
    %p40 = scmp.eq.s32.totalorder %s10, 1
    %p41 = por %p39, %p40
    %p42 = scmp.ne.s32.totalorder %s34, %s37
    %p43 = scmp.eq.s32.totalorder %s10, 0
    %p44 = por %p42, %p43
    %p45 = scmp.ne.s32.totalorder %s34, %s37
    %p46 = scmp.eq.s32.totalorder %s15, 1
    %p47 = por %p45, %p46
    %p48 = scmp.ne.s32.totalorder %s37, %s38
    %p49 = scmp.eq.s32.totalorder %s15, 0
    %p50 = por %p48, %p49
    %p51 = scmp.ne.s32.totalorder %s37, %s38
    %p52 = scmp.eq.s32.totalorder %s16, 1
    %p53 = por %p51, %p52
    %p55 = scmp.ne.s32.totalorder %s38, %s54
    %p56 = scmp.eq.s32.totalorder %s16, 0
    %p57 = por %p55, %p56
    %s59 = sadd.s32 %s58, 1
    %p62 = scmp.eq.s32.totalorder %s10, 1
    %p63 = scmp.ne.s32.totalorder %s58, %s60
    %p64 = scmp.eq.s32.totalorder %s10, 0
    %p65 = por %p63, %p64
    %p66 = scmp.ne.s32.totalorder %s58, %s60
    %p67 = scmp.eq.s32.totalorder %s15, 1
    %p68 = por %p66, %p67
    %p69 = scmp.ne.s32.totalorder %s60, %s61
    %p70 = scmp.eq.s32.totalorder %s15, 0
    %p71 = por %p69, %p70
    %p72 = scmp.ne.s32.totalorder %s60, %s61
    %p73 = scmp.eq.s32.totalorder %s16, 1
    %p74 = por %p72, %p73
    %p76 = scmp.ne.s32.totalorder %s61, %s75
    %p77 = scmp.eq.s32.totalorder %s16, 0
    %p78 = por %p76, %p77
    %s79 = ssub.s32 %s17, %s29
    %s80 = ssub.s32 %s18, %s25
    %s81 = sor.u32 %s79, %s80
    %p82 = scmp.eq.s32.totalorder %s81, 0
    %s84 = sadd.s32 %s83, 1
    %s85 = scalar_select %p82, %s83, %s84
    %p88 = pneg %p82
    %p89 = scmp.eq.s32.totalorder %s10, 1
    %p90 = por %p88, %p89
    %p91 = scmp.ne.s32.totalorder %s83, %s86
    %p92 = scmp.eq.s32.totalorder %s10, 0
    %p93 = por %p91, %p92
    %p94 = scmp.ne.s32.totalorder %s83, %s86
    %p95 = scmp.eq.s32.totalorder %s15, 1
    %p96 = por %p94, %p95
    %p97 = scmp.ne.s32.totalorder %s86, %s87
    %p98 = scmp.eq.s32.totalorder %s15, 0
    %p99 = por %p97, %p98
    %p100 = scmp.ne.s32.totalorder %s86, %s87
    %p101 = scmp.eq.s32.totalorder %s16, 1
    %p102 = por %p100, %p101
    %p104 = scmp.ne.s32.totalorder %s87, %s103
    %p105 = scmp.eq.s32.totalorder %s16, 0
    %p106 = por %p104, %p105
    %s107 = ssub.s32 %s17, %s29
    %s108 = ssub.s32 %s18, %s25
    %s109 = sor.u32 %s107, %s108
    %p110 = scmp.eq.s32.totalorder %s109, 0
    %s112 = sadd.s32 %s111, 1
    %s113 = scalar_select %p110, %s111, %s112
    %p116 = pneg %p110
    %p117 = scmp.eq.s32.totalorder %s10, 1
    %p118 = por %p116, %p117
    %p119 = scmp.ne.s32.totalorder %s111, %s114
    %p120 = scmp.eq.s32.totalorder %s10, 0
    %p121 = por %p119, %p120
    %p122 = scmp.ne.s32.totalorder %s111, %s114
    %p123 = scmp.eq.s32.totalorder %s15, 1
    %p124 = por %p122, %p123
    %p125 = scmp.ne.s32.totalorder %s114, %s115
    %p126 = scmp.eq.s32.totalorder %s15, 0
    %p127 = por %p125, %p126
    %p128 = scmp.ne.s32.totalorder %s114, %s115
    %p129 = scmp.eq.s32.totalorder %s16, 1
    %p130 = por %p128, %p129
    %p132 = scmp.ne.s32.totalorder %s115, %s131
    %p133 = scmp.eq.s32.totalorder %s16, 0
    %p134 = por %p132, %p133
    %p135 = scmp.le.s32.totalorder 1, %s10
    %p136 = scmp.lt.s32.totalorder %s10, 3
    %p137 = pnand %p135, %p136
    %p138 = pneg %p137
    // Predicated region
    $region9: #{bottleneckx_forward.4} parent=5 // pred_check
      _
    $region10: #{bottleneckx_forward.4} parent=5 // pred_check_branch
      %140 = sbr.rel (%p137) target = $region12
    $region11: #{bottleneckx_forward.4} parent=5 // pred_region
      %s141 = ssub.s32 %s10, 1
      // Predicated region
      $region13: #{bottleneckx_forward.4} parent=11 // pred_check
        %p142 = pneg %p71
      $region14: #{bottleneckx_forward.4} parent=11 // pred_check_branch
        %144 = sbr.rel (%p142) target = $region16
      $region15: #{bottleneckx_forward.4} parent=11 // pred_region
        _
      $region16: #{bottleneckx_forward.4} parent=11 // pred_fallthru
        _
    $region12: #{bottleneckx_forward.4} parent=5 // pred_fallthru
      _
    %p145 = scmp.lt.s32.totalorder %s10, 2
    // Predicated region
    $region17: #{bottleneckx_forward.4} parent=5 // pred_check
      %p146 = pneg %p145
    $region18: #{bottleneckx_forward.4} parent=5 // pred_check_branch
      %148 = sbr.rel (%p146) target = $region20
    $region19: #{bottleneckx_forward.4} parent=5 // pred_region
      // Predicated region
      $region21: #{bottleneckx_forward.4} parent=19 // pred_check
        %p149 = pneg %p44
      $region22: #{bottleneckx_forward.4} parent=19 // pred_check_branch
        %151 = sbr.rel (%p149) target = $region24
      $region23: #{bottleneckx_forward.4} parent=19 // pred_region
        %s152 = smul.u32 2, %s18
        %p153 = scmp.lt.s32.totalorder %s17, 1
        %s154 = scalar_select %p153, %s17, 1
        %p155 = scmp.lt.s32.totalorder %s152, 1
        %s156 = scalar_select %p155, %s152, 1
        %s157 = smul.addr %s154, 8
        %s158 = sadd.s32 %s156, %s157
        %s159 = smul.addr %s158, 8
        %s160 = scalar_lea.vmem %s0, %s159
        %s161 = smul.u32 2, %s18
      $region24: #{bottleneckx_forward.4} parent=19 // pred_fallthru
        _
    $region20: #{bottleneckx_forward.4} parent=5 // pred_fallthru
      _
    %p162 = scmp.le.s32.totalorder 1, %s10
    %p163 = scmp.lt.s32.totalorder %s10, 3
    %p164 = pnand %p162, %p163
    %p165 = pneg %p164
    // Predicated region
    $region25: #{bottleneckx_forward.4} parent=5 // pred_check
      _
    $region26: #{bottleneckx_forward.4} parent=5 // pred_check_branch
      %167 = sbr.rel (%p164) target = $region28
    $region27: #{bottleneckx_forward.4} parent=5 // pred_region
      %s168 = ssub.s32 %s10, 1
      %s169 = smul.u32 2, %s20
      %p170 = scmp.lt.s32.totalorder %s19, 1
      %s171 = scalar_select %p170, %s19, 1
      %p172 = scmp.lt.s32.totalorder %s169, 1
      %s173 = scalar_select %p172, %s169, 1
      %s174 = smul.addr %s171, 8
      %s175 = sadd.s32 %s173, %s174
      %s176 = smul.addr %s175, 8
      %s177 = scalar_lea.vmem %s0, %s176
      %p178 = pneg %p50
      %p179 = pneg %p47
      %p180 = pneg %p71
      %p181 = pneg %p68
      %p182 = pneg %p99
      %p183 = pneg %p96
      %s184 = smul.u32 2, %s20
      %p185 = scmp.lt.s32.totalorder %s19, 1
      %s186 = scalar_select %p185, %s19, 1
      %p187 = scmp.lt.s32.totalorder %s184, 1
      %s188 = scalar_select %p187, %s184, 1
      %s189 = smul.addr %s186, 8
      %s190 = sadd.s32 %s188, %s189
      %s191 = smul.addr %s190, 4
      %s192 = scalar_lea.vmem %s2, %s191
      %p193 = pneg %p127
      %p194 = pneg %p124
      %p195 = scmp.lt.s32.totalorder %s19, 1
      %s196 = scalar_select %p195, %s19, 1
      %p197 = scmp.lt.s32.totalorder %s20, 0
      %s198 = scalar_select %p197, %s20, 0
      %s199 = smul.addr %s198, 4
      %s200 = smul.addr %s196, 4
      %s201 = sadd.s32 %s199, %s200
      %s202 = smul.addr %s201, 8
      %s203 = scalar_lea.vmem %s3, %s202
      %s204 = smul.u32 2, %s20
      %p205 = scmp.lt.s32.totalorder %s19, 1
      %s206 = scalar_select %p205, %s19, 1
      %p207 = scmp.lt.s32.totalorder %s204, 1
      %s208 = scalar_select %p207, %s204, 1
      %s209 = smul.addr %s206, 8
      %s210 = sadd.s32 %s208, %s209
      %s211 = smul.addr %s210, 8
      %s212 = scalar_lea.vmem %s0, %s211
      %s213 = smul.u32 2, %s20
      %s214 = smul.u32 2, %s20
      %p215 = scmp.lt.s32.totalorder %s19, 1
      %s216 = scalar_select %p215, %s19, 1
      %p217 = scmp.lt.s32.totalorder %s214, 1
      %s218 = scalar_select %p217, %s214, 1
      %s219 = smul.addr %s216, 8
      %s220 = sadd.s32 %s218, %s219
      %s221 = smul.addr %s220, 4
      %s222 = scalar_lea.vmem %s2, %s221
      %s223 = smul.u32 2, %s20
      %p224 = scmp.lt.s32.totalorder %s19, 1
      %s225 = scalar_select %p224, %s19, 1
      %p226 = scmp.lt.s32.totalorder %s20, 0
      %s227 = scalar_select %p226, %s20, 0
      %s228 = smul.addr %s227, 4
      %s229 = smul.addr %s225, 4
      %s230 = sadd.s32 %s228, %s229
      %s231 = smul.addr %s230, 8
      %s232 = scalar_lea.vmem %s3, %s231
      %v234 = vld [vmem:[%s212] sm:$0xff]
      %v235 = vld [vmem:[%s212 + $0x8] sm:$0xff]
      %v236 = vld [vmem:[%s212 + $0x10] sm:$0xff]
      %v237 = vld [vmem:[%s212 + $0x18] sm:$0xff]
      %v238 = vld [vmem:[%s212 + $0x20] sm:$0xff]
      %v239 = vld [vmem:[%s212 + $0x28] sm:$0xff]
      %v240 = vld [vmem:[%s212 + $0x30] sm:$0xff]
      %v241 = vld [vmem:[%s212 + $0x38] sm:$0xff]
      %v242 = vpack.c.bf16 %v236, %v234
      %v243 = vpack.c.bf16 %v237, %v235
      %v244 = vpack.c.bf16 %v240, %v238
      %v245 = vpack.c.bf16 %v241, %v239
      %v246 = vld [vmem:[%s1] sm:$0xf]
      %v247 = vld [vmem:[%s1 + $0x4] sm:$0xf]
      %v248 = vld [vmem:[%s1 + $0x8] sm:$0xf]
      %v249 = vld [vmem:[%s1 + $0xc] sm:$0xf]
      %v254 = vunpack.c.l.b16 %v246
      %v255 = vunpack.c.l.b16 %v247
      %v256 = vunpack.c.l.b16 %v248
      %v257 = vunpack.c.l.b16 %v249
      %v258 = vpack.c.b16 %v255, %v254
      %v259 = vpack.c.b16 %v257, %v256
      %vm260 = vcmask 261120
      %v262 = vsel %vm260, %v258, 0
      %v265 = vsel %vm260, %v259, 0
      %267 = vmatprep.subr.bf16.mxu0 %v243
      %268 = vmatpush1.bf16.msra.mxu0 %v242
      %269 = vmatprep.subr.bf16.mxu0 %v245
      %270 = vmatpush1.bf16.msra.mxu0 %v244
      %271 = vmatprep.subr.bf16.mxu0 0
      %272 = vmatpush1.bf16.msra.mxu0 0
      %273 = vmatprep.subr.bf16.mxu0 0
      %274 = vmatpush1.bf16.msra.mxu0 0
      %275 = vmatprep.subr.bf16.mxu0 0
      %276 = vmatpush1.bf16.msra.mxu0 0
      %277 = vmatprep.subr.bf16.mxu0 0
      %278 = vmatpush1.bf16.msra.mxu0 0
      %279 = vmatprep.subr.bf16.mxu0 0
      %280 = vmatpush1.bf16.msra.mxu0 0
      %281 = vmatprep.subr.bf16.mxu0 0
      %282 = vmatpush1.bf16.msra.mxu0 0
      %283 = vmatprep.subr.bf16.mxu0 0
      %284 = vmatpush1.bf16.msra.mxu0 0
      %285 = vmatprep.subr.bf16.mxu0 0
      %286 = vmatpush1.bf16.msra.mxu0 0
      %287 = vmatprep.subr.bf16.mxu0 0
      %288 = vmatpush1.bf16.msra.mxu0 0
      %289 = vmatprep.subr.bf16.mxu0 0
      %290 = vmatpush1.bf16.msra.mxu0 0
      %291 = vmatprep.subr.bf16.mxu0 0
      %292 = vmatpush1.bf16.msra.mxu0 0
      %293 = vmatprep.subr.bf16.mxu0 0
      %294 = vmatpush1.bf16.msra.mxu0 0
      %295 = vmatprep.subr.bf16.mxu0 0
      %296 = vmatpush1.bf16.msra.mxu0 0
      %297 = vmatprep.subr.bf16.mxu0 0
      %298 = vmatpush1.bf16.msra.mxu0 0
      %299 = vmatprep.mubr.bf16.mxu0 0
      %300 = vmatmul.mubr.bf16.gmra.mrb[0].mxu0 %v262
      %v301 = vpop.f32.mrb[0].mxu0
      %v302 = vadd.f32 0.0, %v301
      %v303 = vpop.f32.mrb[0].mxu0
      %v304 = vadd.f32 0.0, %v303
      %v305 = vpop.f32.mrb[0].mxu0
      %v306 = vadd.f32 0.0, %v305
      %v307 = vpop.f32.mrb[0].mxu0
      %v308 = vadd.f32 0.0, %v307
      %309 = vmatprep.mubr.bf16.mxu0 0
      %310 = vmatmul.mubr.bf16.gmra.mrb[0].mxu0 %v265
      %v311 = vpop.f32.mrb[0].mxu0
      %v312 = vadd.f32 0.0, %v311
      %v313 = vpop.f32.mrb[0].mxu0
      %v314 = vadd.f32 0.0, %v313
      %v315 = vpop.f32.mrb[0].mxu0
      %v316 = vadd.f32 0.0, %v315
      %v317 = vpop.f32.mrb[0].mxu0
      %v318 = vadd.f32 0.0, %v317
      %319 = vdwg.mxu0
      %v320 = vpack.c.bf16 %v306, %v302
      %v321 = vpack.c.bf16 %v308, %v304
      %v322 = vpack.c.bf16 %v316, %v312
      %v323 = vpack.c.bf16 %v318, %v314
      %v328 = vunpack.c.l.b16 %v320
      %v329 = vunpack.c.l.b16 %v321
      %v330 = vunpack.c.h.b16 %v320
      %v331 = vunpack.c.h.b16 %v321
      %v332 = vunpack.c.l.b16 %v322
      %v333 = vunpack.c.l.b16 %v323
      %v334 = vunpack.c.h.b16 %v322
      %v335 = vunpack.c.h.b16 %v323
      %v336 = vpack.c.b16 %v329, %v328
      %v337 = vpack.c.b16 %v331, %v330
      %v338 = vpack.c.b16 %v333, %v332
      %v339 = vpack.c.b16 %v335, %v334
      %344 = vst [vmem:[%s222] sm:$0xff] %v336
      %345 = vst [vmem:[%s222 + $0x8] sm:$0xff] %v337
      %346 = vst [vmem:[%s222 + $0x10] sm:$0xff] %v338
      %347 = vst [vmem:[%s222 + $0x18] sm:$0xff] %v339
      %v348 = vadd.f32 %v302, %v304
      %349 = vadd.xlane.f32.xlu0 %v348
      %v350 = vpop.xlane.xlu0 %349
      %v351 = vadd.f32 %v306, %v308
      %352 = vadd.xlane.f32.xlu0 %v351
      %v353 = vpop.xlane.xlu0 %352
      %v354 = vadd.f32 %v312, %v314
      %355 = vadd.xlane.f32.xlu0 %v354
      %v356 = vpop.xlane.xlu0 %355
      %v357 = vadd.f32 %v316, %v318
      %358 = vadd.xlane.f32.xlu0 %v357
      %v359 = vpop.xlane.xlu0 %358
      %v360 = vmul.f32 %v302, %v302
      %v361 = vmul.f32 %v304, %v304
      %v362 = vmul.f32 %v306, %v306
      %v363 = vmul.f32 %v308, %v308
      %v364 = vmul.f32 %v312, %v312
      %v365 = vmul.f32 %v314, %v314
      %v366 = vmul.f32 %v316, %v316
      %v367 = vmul.f32 %v318, %v318
      %v368 = vadd.f32 %v360, %v361
      %369 = vadd.xlane.f32.xlu0 %v368
      %v370 = vpop.xlane.xlu0 %369
      %v371 = vadd.f32 %v362, %v363
      %372 = vadd.xlane.f32.xlu0 %v371
      %v373 = vpop.xlane.xlu0 %372
      %v374 = vadd.f32 %v364, %v365
      %375 = vadd.xlane.f32.xlu0 %v374
      %v376 = vpop.xlane.xlu0 %375
      %v377 = vadd.f32 %v366, %v367
      %378 = vadd.xlane.f32.xlu0 %v377
      %v379 = vpop.xlane.xlu0 %378
      %vm380 = vcmask 7168
      %v381 = vsel %vm380, %v350, %v370
      %v382 = vsel %vm380, %v353, %v373
      %v383 = vsel %vm380, %v356, %v376
      %v384 = vsel %vm380, %v359, %v379
      %vm385 = vcmask 15360
      %386 = vst.msk [vmem:[%s232] sm:$0xff] %vm385, %v381
      %387 = vst.msk [vmem:[%s232 + $0x8] sm:$0xff] %vm385, %v382
      %388 = vst.msk [vmem:[%s232 + $0x10] sm:$0xff] %vm385, %v383
      %389 = vst.msk [vmem:[%s232 + $0x18] sm:$0xff] %vm385, %v384
      %s390 = smul.u32 2, %s20
      %p391 = scmp.lt.s32.totalorder %s19, 1
      %s392 = scalar_select %p391, %s19, 1
      %p393 = scmp.lt.s32.totalorder %s390, 1
      %s394 = scalar_select %p393, %s390, 1
      %s395 = smul.addr %s392, 8
      %s396 = sadd.s32 %s394, %s395
      %s397 = smul.addr %s396, 4
      %s398 = scalar_lea.vmem %s2, %s397
      %p399 = scmp.lt.s32.totalorder %s19, 1
      %s400 = scalar_select %p399, %s19, 1
      %p401 = scmp.lt.s32.totalorder %s20, 0
      %s402 = scalar_select %p401, %s20, 0
      %s403 = smul.addr %s402, 4
      %s404 = smul.addr %s400, 4
      %s405 = sadd.s32 %s403, %s404
      %s406 = smul.addr %s405, 8
      %s407 = scalar_lea.vmem %s3, %s406
      // Predicated region
      $region29: #{bottleneckx_forward.4} parent=27 // pred_check
        %p408 = pneg %p96
      $region30: #{bottleneckx_forward.4} parent=27 // pred_check_branch
        %410 = sbr.rel (%p408) target = $region32
      $region31: #{bottleneckx_forward.4} parent=27 // pred_region
        %s411 = smul.u32 2, %s20
      $region32: #{bottleneckx_forward.4} parent=27 // pred_fallthru
        _
      // Predicated region
      $region33: #{bottleneckx_forward.4} parent=27 // pred_check
        %p412 = pneg %p124
      $region34: #{bottleneckx_forward.4} parent=27 // pred_check_branch
        %414 = sbr.rel (%p412) target = $region36
      $region35: #{bottleneckx_forward.4} parent=27 // pred_region
        _
      $region36: #{bottleneckx_forward.4} parent=27 // pred_fallthru
        _
    $region28: #{bottleneckx_forward.4} parent=5 // pred_fallthru
      _
    %p415 = scmp.le.s32.totalorder 2, %s10
    // Predicated region
    $region37: #{bottleneckx_forward.4} parent=5 // pred_check
      %p416 = pneg %p415
    $region38: #{bottleneckx_forward.4} parent=5 // pred_check_branch
      %418 = sbr.rel (%p416) target = $region40
    $region39: #{bottleneckx_forward.4} parent=5 // pred_region
      %s419 = ssub.s32 %s10, 2
      // Predicated region
      $region41: #{bottleneckx_forward.4} parent=39 // pred_check
        %p420 = pneg %p102
      $region42: #{bottleneckx_forward.4} parent=39 // pred_check_branch
        %422 = sbr.rel (%p420) target = $region44
      $region43: #{bottleneckx_forward.4} parent=39 // pred_region
        %s423 = smul.u32 2, %s22
        %p424 = scmp.lt.s32.totalorder %s21, 1
        %s425 = scalar_select %p424, %s21, 1
        %p426 = scmp.lt.s32.totalorder %s423, 1
        %s427 = scalar_select %p426, %s423, 1
        %s428 = smul.addr %s425, 8
        %s429 = sadd.s32 %s427, %s428
        %s430 = smul.addr %s429, 4
        %s431 = scalar_lea.vmem %s2, %s430
      $region44: #{bottleneckx_forward.4} parent=39 // pred_fallthru
        _
      // Predicated region
      $region45: #{bottleneckx_forward.4} parent=39 // pred_check
        %p432 = pneg %p130
      $region46: #{bottleneckx_forward.4} parent=39 // pred_check_branch
        %434 = sbr.rel (%p432) target = $region48
      $region47: #{bottleneckx_forward.4} parent=39 // pred_region
        %p435 = scmp.lt.s32.totalorder %s21, 1
        %s436 = scalar_select %p435, %s21, 1
        %p437 = scmp.lt.s32.totalorder %s22, 0
        %s438 = scalar_select %p437, %s22, 0
        %s439 = smul.addr %s438, 4
        %s440 = smul.addr %s436, 4
        %s441 = sadd.s32 %s439, %s440
        %s442 = smul.addr %s441, 8
        %s443 = scalar_lea.vmem %s3, %s442
      $region48: #{bottleneckx_forward.4} parent=39 // pred_fallthru
        _
    $region40: #{bottleneckx_forward.4} parent=5 // pred_fallthru
      _
  $region6: #{bottleneckx_forward.4} parent=0 // loop_footer
    %s14 = sadd.s32 1, %s10
  $region7: #{bottleneckx_forward.4} parent=0 // loop_footer_branch
    %9 = sbr.rel target = $region3
  $region8: #{bottleneckx_forward.4} parent=0 // loop_exit
    _

// kernel: bottleneckx_forward.7
$region0: #{bottleneckx_forward.7}
  #allocation0 [shape = 'u32[]', space=smem, size = 0x4, offset = 0x4, fixed_abs, tag = 'smem constant byte address 0x4 - core index']
  #allocation1 [shape = 'u32[144,128]{1,0:T(1,128)}', space=vmem, size = 0x12000, scoped, tag = 'internal scratch']
  %s0 = inlined_call_operand.vmem [shape: bf16[2,32,256], index: 0, kind: input, shape index: {}]
  %s1 = inlined_call_operand.vmem [shape: f32[2,32,256], index: 1, kind: input, shape index: {}]
  %s2 = inlined_call_operand.vmem [shape: f32[32,1], index: 2, kind: input, shape index: {}]
  %s3 = inlined_call_operand.vmem [shape: f32[32,1], index: 3, kind: input, shape index: {}]
  %s4 = inlined_call_operand.vmem [shape: f32[2,32,256], index: 4, kind: output, shape index: {}]
  %s5 = sld [smem:[#allocation0]]
  $region49: #{bottleneckx_forward.7} parent=0
    _
  %s7 = ssub.s32 1, %s5
  %s8 = scalar_select 0, %s7, %s5
  loop: start=0, step=1, limit=4
  $region2: #{bottleneckx_forward.7} parent=0 // loop_pre_header
    _
  $region3: #{bottleneckx_forward.7} parent=0 // loop_header
    %s10 = sphi 0, %s14
    %p11 = scmp.ge.s32.totalorder %s10, 4
    %s17 = sphi 0, %s29
    %s18 = sphi 0, %s25
    %s19 = sphi 0, %s17
    %s20 = sphi 0, %s18
    %s21 = sphi 0, %s19
    %s22 = sphi 0, %s20
    %s34 = sphi 0, %s36
    %s37 = sphi 0, %s34
    %s38 = sphi 0, %s37
    %s54 = sphi 0, %s38
    %s62 = sphi 0, %s64
    %s65 = sphi 0, %s62
    %s66 = sphi 0, %s65
    %s82 = sphi 0, %s66
    %s86 = sphi 0, %s86
    %s88 = sphi 0, %s86
    %s89 = sphi 0, %s88
    %s103 = sphi 0, %s89
    %s107 = sphi 0, %s107
    %s109 = sphi 0, %s107
    %s110 = sphi 0, %s109
    %s124 = sphi 0, %s110
    %s132 = sphi 0, %s134
    %s135 = sphi 0, %s132
    %s136 = sphi 0, %s135
    %s152 = sphi 0, %s136
  $region4: #{bottleneckx_forward.7} parent=0 // loop_header_branch
    %13 = sbr.rel (%p11) target = $region8
  $region5: #{bottleneckx_forward.7} parent=0 // loop_body
    %s15 = ssub.s32 %s10, 1
    %s16 = ssub.s32 %s10, 2
    %s23 = sadd.s32 1, %s18
    %p24 = scmp.ge.s32.totalorder %s23, 1
    %s25 = scalar_select %p24, 0, %s23
    %s26 = sadd.s32 1, %s17
    %s27 = scalar_select %p24, %s26, %s17
    %p28 = scmp.ge.s32.totalorder %s27, 2
    %s29 = scalar_select %p28, 0, %s27
    %s30 = ssub.s32 %s17, %s29
    %s31 = ssub.s32 %s18, %s25
    %s32 = sor.u32 %s30, %s31
    %p33 = scmp.eq.s32.totalorder %s32, 0
    %s35 = sadd.s32 %s34, 1
    %s36 = scalar_select %p33, %s34, %s35
    %p39 = pneg %p33
    %p40 = scmp.eq.s32.totalorder %s10, 1
    %p41 = por %p39, %p40
    %p42 = scmp.ne.s32.totalorder %s34, %s37
    %p43 = scmp.eq.s32.totalorder %s10, 0
    %p44 = por %p42, %p43
    %p45 = scmp.ne.s32.totalorder %s34, %s37
    %p46 = scmp.eq.s32.totalorder %s15, 1
    %p47 = por %p45, %p46
    %p48 = scmp.ne.s32.totalorder %s37, %s38
    %p49 = scmp.eq.s32.totalorder %s15, 0
    %p50 = por %p48, %p49
    %p51 = scmp.ne.s32.totalorder %s37, %s38
    %p52 = scmp.eq.s32.totalorder %s16, 1
    %p53 = por %p51, %p52
    %p55 = scmp.ne.s32.totalorder %s38, %s54
    %p56 = scmp.eq.s32.totalorder %s16, 0
    %p57 = por %p55, %p56
    %s58 = ssub.s32 %s17, %s29
    %s59 = ssub.s32 %s18, %s25
    %s60 = sor.u32 %s58, %s59
    %p61 = scmp.eq.s32.totalorder %s60, 0
    %s63 = sadd.s32 %s62, 1
    %s64 = scalar_select %p61, %s62, %s63
    %p67 = pneg %p61
    %p68 = scmp.eq.s32.totalorder %s10, 1
    %p69 = por %p67, %p68
    %p70 = scmp.ne.s32.totalorder %s62, %s65
    %p71 = scmp.eq.s32.totalorder %s10, 0
    %p72 = por %p70, %p71
    %p73 = scmp.ne.s32.totalorder %s62, %s65
    %p74 = scmp.eq.s32.totalorder %s15, 1
    %p75 = por %p73, %p74
    %p76 = scmp.ne.s32.totalorder %s65, %s66
    %p77 = scmp.eq.s32.totalorder %s15, 0
    %p78 = por %p76, %p77
    %p79 = scmp.ne.s32.totalorder %s65, %s66
    %p80 = scmp.eq.s32.totalorder %s16, 1
    %p81 = por %p79, %p80
    %p83 = scmp.ne.s32.totalorder %s66, %s82
    %p84 = scmp.eq.s32.totalorder %s16, 0
    %p85 = por %p83, %p84
    %s87 = sadd.s32 %s86, 1
    %p90 = scmp.eq.s32.totalorder %s10, 1
    %p91 = scmp.ne.s32.totalorder %s86, %s88
    %p92 = scmp.eq.s32.totalorder %s10, 0
    %p93 = por %p91, %p92
    %p94 = scmp.ne.s32.totalorder %s86, %s88
    %p95 = scmp.eq.s32.totalorder %s15, 1
    %p96 = por %p94, %p95
    %p97 = scmp.ne.s32.totalorder %s88, %s89
    %p98 = scmp.eq.s32.totalorder %s15, 0
    %p99 = por %p97, %p98
    %p100 = scmp.ne.s32.totalorder %s88, %s89
    %p101 = scmp.eq.s32.totalorder %s16, 1
    %p102 = por %p100, %p101
    %p104 = scmp.ne.s32.totalorder %s89, %s103
    %p105 = scmp.eq.s32.totalorder %s16, 0
    %p106 = por %p104, %p105
    %s108 = sadd.s32 %s107, 1
    %p111 = scmp.eq.s32.totalorder %s10, 1
    %p112 = scmp.ne.s32.totalorder %s107, %s109
    %p113 = scmp.eq.s32.totalorder %s10, 0
    %p114 = por %p112, %p113
    %p115 = scmp.ne.s32.totalorder %s107, %s109
    %p116 = scmp.eq.s32.totalorder %s15, 1
    %p117 = por %p115, %p116
    %p118 = scmp.ne.s32.totalorder %s109, %s110
    %p119 = scmp.eq.s32.totalorder %s15, 0
    %p120 = por %p118, %p119
    %p121 = scmp.ne.s32.totalorder %s109, %s110
    %p122 = scmp.eq.s32.totalorder %s16, 1
    %p123 = por %p121, %p122
    %p125 = scmp.ne.s32.totalorder %s110, %s124
    %p126 = scmp.eq.s32.totalorder %s16, 0
    %p127 = por %p125, %p126
    %s128 = ssub.s32 %s17, %s29
    %s129 = ssub.s32 %s18, %s25
    %s130 = sor.u32 %s128, %s129
    %p131 = scmp.eq.s32.totalorder %s130, 0
    %s133 = sadd.s32 %s132, 1
    %s134 = scalar_select %p131, %s132, %s133
    %p137 = pneg %p131
    %p138 = scmp.eq.s32.totalorder %s10, 1
    %p139 = por %p137, %p138
    %p140 = scmp.ne.s32.totalorder %s132, %s135
    %p141 = scmp.eq.s32.totalorder %s10, 0
    %p142 = por %p140, %p141
    %p143 = scmp.ne.s32.totalorder %s132, %s135
    %p144 = scmp.eq.s32.totalorder %s15, 1
    %p145 = por %p143, %p144
    %p146 = scmp.ne.s32.totalorder %s135, %s136
    %p147 = scmp.eq.s32.totalorder %s15, 0
    %p148 = por %p146, %p147
    %p149 = scmp.ne.s32.totalorder %s135, %s136
    %p150 = scmp.eq.s32.totalorder %s16, 1
    %p151 = por %p149, %p150
    %p153 = scmp.ne.s32.totalorder %s136, %s152
    %p154 = scmp.eq.s32.totalorder %s16, 0
    %p155 = por %p153, %p154
    %p156 = scmp.le.s32.totalorder 1, %s10
    %p157 = scmp.lt.s32.totalorder %s10, 3
    %p158 = pnand %p156, %p157
    %p159 = pneg %p158
    // Predicated region
    $region9: #{bottleneckx_forward.7} parent=5 // pred_check
      _
    $region10: #{bottleneckx_forward.7} parent=5 // pred_check_branch
      %161 = sbr.rel (%p158) target = $region12
    $region11: #{bottleneckx_forward.7} parent=5 // pred_region
      %s162 = ssub.s32 %s10, 1
      // Predicated region
      $region13: #{bottleneckx_forward.7} parent=11 // pred_check
        %p163 = pneg %p99
      $region14: #{bottleneckx_forward.7} parent=11 // pred_check_branch
        %165 = sbr.rel (%p163) target = $region16
      $region15: #{bottleneckx_forward.7} parent=11 // pred_region
        _
      $region16: #{bottleneckx_forward.7} parent=11 // pred_fallthru
        _
      // Predicated region
      $region17: #{bottleneckx_forward.7} parent=11 // pred_check
        %p166 = pneg %p120
      $region18: #{bottleneckx_forward.7} parent=11 // pred_check_branch
        %168 = sbr.rel (%p166) target = $region20
      $region19: #{bottleneckx_forward.7} parent=11 // pred_region
        _
      $region20: #{bottleneckx_forward.7} parent=11 // pred_fallthru
        _
    $region12: #{bottleneckx_forward.7} parent=5 // pred_fallthru
      _
    %p169 = scmp.lt.s32.totalorder %s10, 2
    // Predicated region
    $region21: #{bottleneckx_forward.7} parent=5 // pred_check
      %p170 = pneg %p169
    $region22: #{bottleneckx_forward.7} parent=5 // pred_check_branch
      %172 = sbr.rel (%p170) target = $region24
    $region23: #{bottleneckx_forward.7} parent=5 // pred_region
      // Predicated region
      $region25: #{bottleneckx_forward.7} parent=23 // pred_check
        %p173 = pneg %p44
      $region26: #{bottleneckx_forward.7} parent=23 // pred_check_branch
        %175 = sbr.rel (%p173) target = $region28
      $region27: #{bottleneckx_forward.7} parent=23 // pred_region
        %s176 = smul.u32 2, %s18
        %p177 = scmp.lt.s32.totalorder %s17, 1
        %s178 = scalar_select %p177, %s17, 1
        %p179 = scmp.lt.s32.totalorder %s176, 1
        %s180 = scalar_select %p179, %s176, 1
        %s181 = smul.addr %s178, 8
        %s182 = sadd.s32 %s180, %s181
        %s183 = smul.addr %s182, 4
        %s184 = scalar_lea.vmem %s0, %s183
        %s185 = smul.u32 2, %s18
      $region28: #{bottleneckx_forward.7} parent=23 // pred_fallthru
        _
      // Predicated region
      $region29: #{bottleneckx_forward.7} parent=23 // pred_check
        %p186 = pneg %p72
      $region30: #{bottleneckx_forward.7} parent=23 // pred_check_branch
        %188 = sbr.rel (%p186) target = $region32
      $region31: #{bottleneckx_forward.7} parent=23 // pred_region
        %s189 = smul.u32 2, %s18
        %p190 = scmp.lt.s32.totalorder %s17, 1
        %s191 = scalar_select %p190, %s17, 1
        %p192 = scmp.lt.s32.totalorder %s189, 1
        %s193 = scalar_select %p192, %s189, 1
        %s194 = smul.addr %s191, 8
        %s195 = sadd.s32 %s193, %s194
        %s196 = smul.addr %s195, 8
        %s197 = scalar_lea.vmem %s1, %s196
        %s198 = smul.u32 2, %s18
      $region32: #{bottleneckx_forward.7} parent=23 // pred_fallthru
        _
    $region24: #{bottleneckx_forward.7} parent=5 // pred_fallthru
      _
    %p199 = scmp.le.s32.totalorder 1, %s10
    %p200 = scmp.lt.s32.totalorder %s10, 3
    %p201 = pnand %p199, %p200
    %p202 = pneg %p201
    // Predicated region
    $region33: #{bottleneckx_forward.7} parent=5 // pred_check
      _
    $region34: #{bottleneckx_forward.7} parent=5 // pred_check_branch
      %204 = sbr.rel (%p201) target = $region36
    $region35: #{bottleneckx_forward.7} parent=5 // pred_region
      %s205 = ssub.s32 %s10, 1
      %s206 = smul.u32 2, %s20
      %p207 = scmp.lt.s32.totalorder %s19, 1
      %s208 = scalar_select %p207, %s19, 1
      %p209 = scmp.lt.s32.totalorder %s206, 1
      %s210 = scalar_select %p209, %s206, 1
      %s211 = smul.addr %s208, 8
      %s212 = sadd.s32 %s210, %s211
      %s213 = smul.addr %s212, 4
      %s214 = scalar_lea.vmem %s0, %s213
      %p215 = pneg %p50
      %p216 = pneg %p47
      %s217 = smul.u32 2, %s20
      %p218 = scmp.lt.s32.totalorder %s19, 1
      %s219 = scalar_select %p218, %s19, 1
      %p220 = scmp.lt.s32.totalorder %s217, 1
      %s221 = scalar_select %p220, %s217, 1
      %s222 = smul.addr %s219, 8
      %s223 = sadd.s32 %s221, %s222
      %s224 = smul.addr %s223, 8
      %s225 = scalar_lea.vmem %s1, %s224
      %p226 = pneg %p78
      %p227 = pneg %p75
      %p228 = pneg %p99
      %p229 = pneg %p96
      %p230 = pneg %p120
      %p231 = pneg %p117
      %p232 = pneg %p148
      %p233 = pneg %p145
      %s234 = smul.u32 2, %s20
      %p235 = scmp.lt.s32.totalorder %s19, 1
      %s236 = scalar_select %p235, %s19, 1
      %p237 = scmp.lt.s32.totalorder %s234, 1
      %s238 = scalar_select %p237, %s234, 1
      %s239 = smul.addr %s236, 8
      %s240 = sadd.s32 %s238, %s239
      %s241 = smul.addr %s240, 8
      %s242 = scalar_lea.vmem %s4, %s241
      %s243 = smul.u32 2, %s20
      %p244 = scmp.lt.s32.totalorder %s19, 1
      %s245 = scalar_select %p244, %s19, 1
      %p246 = scmp.lt.s32.totalorder %s243, 1
      %s247 = scalar_select %p246, %s243, 1
      %s248 = smul.addr %s245, 8
      %s249 = sadd.s32 %s247, %s248
      %s250 = smul.addr %s249, 4
      %s251 = scalar_lea.vmem %s0, %s250
      %s252 = smul.u32 2, %s20
      %s253 = smul.u32 2, %s20
      %p254 = scmp.lt.s32.totalorder %s19, 1
      %s255 = scalar_select %p254, %s19, 1
      %p256 = scmp.lt.s32.totalorder %s253, 1
      %s257 = scalar_select %p256, %s253, 1
      %s258 = smul.addr %s255, 8
      %s259 = sadd.s32 %s257, %s258
      %s260 = smul.addr %s259, 8
      %s261 = scalar_lea.vmem %s1, %s260
      %s262 = smul.u32 2, %s20
      %s263 = smul.u32 2, %s20
      %p264 = scmp.lt.s32.totalorder %s19, 1
      %s265 = scalar_select %p264, %s19, 1
      %p266 = scmp.lt.s32.totalorder %s263, 1
      %s267 = scalar_select %p266, %s263, 1
      %s268 = smul.addr %s265, 8
      %s269 = sadd.s32 %s267, %s268
      %s270 = smul.addr %s269, 8
      %s271 = scalar_lea.vmem %s4, %s270
      %s272 = smul.u32 2, %s20
      %v273 = vld [vmem:[%s251] sm:$0xff]
      %v274 = vld [vmem:[%s251 + $0x8] sm:$0xff]
      %v275 = vld [vmem:[%s251 + $0x10] sm:$0xff]
      %v276 = vld [vmem:[%s251 + $0x18] sm:$0xff]
      %v277 = vunpack.c.l.bf16 %v273
      %v278 = vunpack.c.h.bf16 %v273
      %v279 = vunpack.c.l.bf16 %v274
      %v280 = vunpack.c.h.bf16 %v274
      %v281 = vunpack.c.l.bf16 %v275
      %v282 = vunpack.c.h.bf16 %v275
      %v283 = vunpack.c.l.bf16 %v276
      %v284 = vunpack.c.h.bf16 %v276
      %v285 = vld [vmem:[%s2] sm:$0xff]
      %v286 = vld [vmem:[%s2 + $0x8] sm:$0xff]
      %v287 = vld [vmem:[%s2 + $0x10] sm:$0xff]
      %v288 = vld [vmem:[%s2 + $0x18] sm:$0xff]
      %290 = vset.pattern.permute.xlu0 0
      %291 = vperm.xlu0 %290, %v285
      %v292 = vpop.permute.xlu0 %291
      %295 = vset.pattern.permute.xlu0 0
      %296 = vperm.xlu0 %295, %v286
      %v297 = vpop.permute.xlu0 %296
      %300 = vset.pattern.permute.xlu0 0
      %301 = vperm.xlu0 %300, %v287
      %v302 = vpop.permute.xlu0 %301
      %305 = vset.pattern.permute.xlu0 0
      %306 = vperm.xlu0 %305, %v288
      %v307 = vpop.permute.xlu0 %306
      %v309 = vmul.f32 %v277, %v292
      %v310 = vmul.f32 %v278, %v292
      %v311 = vmul.f32 %v279, %v297
      %v312 = vmul.f32 %v280, %v297
      %v313 = vmul.f32 %v281, %v302
      %v314 = vmul.f32 %v282, %v302
      %v315 = vmul.f32 %v283, %v307
      %v316 = vmul.f32 %v284, %v307
      %v317 = vld [vmem:[%s3] sm:$0xff]
      %v318 = vld [vmem:[%s3 + $0x8] sm:$0xff]
      %v319 = vld [vmem:[%s3 + $0x10] sm:$0xff]
      %v320 = vld [vmem:[%s3 + $0x18] sm:$0xff]
      %322 = vset.pattern.permute.xlu0 0
      %323 = vperm.xlu0 %322, %v317
      %v324 = vpop.permute.xlu0 %323
      %327 = vset.pattern.permute.xlu0 0
      %328 = vperm.xlu0 %327, %v318
      %v329 = vpop.permute.xlu0 %328
      %332 = vset.pattern.permute.xlu0 0
      %333 = vperm.xlu0 %332, %v319
      %v334 = vpop.permute.xlu0 %333
      %337 = vset.pattern.permute.xlu0 0
      %338 = vperm.xlu0 %337, %v320
      %v339 = vpop.permute.xlu0 %338
      %v341 = vadd.f32 %v309, %v324
      %v342 = vadd.f32 %v310, %v324
      %v343 = vadd.f32 %v311, %v329
      %v344 = vadd.f32 %v312, %v329
      %v345 = vadd.f32 %v313, %v334
      %v346 = vadd.f32 %v314, %v334
      %v347 = vadd.f32 %v315, %v339
      %v348 = vadd.f32 %v316, %v339
      %v349 = vld [vmem:[%s261] sm:$0xff]
      %v350 = vld [vmem:[%s261 + $0x8] sm:$0xff]
      %v351 = vld [vmem:[%s261 + $0x10] sm:$0xff]
      %v352 = vld [vmem:[%s261 + $0x18] sm:$0xff]
      %v353 = vld [vmem:[%s261 + $0x20] sm:$0xff]
      %v354 = vld [vmem:[%s261 + $0x28] sm:$0xff]
      %v355 = vld [vmem:[%s261 + $0x30] sm:$0xff]
      %v356 = vld [vmem:[%s261 + $0x38] sm:$0xff]
      %v357 = vadd.f32 %v341, %v349
      %v358 = vadd.f32 %v342, %v350
      %v359 = vadd.f32 %v343, %v351
      %v360 = vadd.f32 %v344, %v352
      %v361 = vadd.f32 %v345, %v353
      %v362 = vadd.f32 %v346, %v354
      %v363 = vadd.f32 %v347, %v355
      %v364 = vadd.f32 %v348, %v356
      %v365 = vmax.f32 %v357, 0.0
      %v366 = vmax.f32 %v358, 0.0
      %v367 = vmax.f32 %v359, 0.0
      %v368 = vmax.f32 %v360, 0.0
      %v369 = vmax.f32 %v361, 0.0
      %v370 = vmax.f32 %v362, 0.0
      %v371 = vmax.f32 %v363, 0.0
      %v372 = vmax.f32 %v364, 0.0
      %373 = vst [vmem:[%s271] sm:$0xff] %v365
      %374 = vst [vmem:[%s271 + $0x8] sm:$0xff] %v366
      %375 = vst [vmem:[%s271 + $0x10] sm:$0xff] %v367
      %376 = vst [vmem:[%s271 + $0x18] sm:$0xff] %v368
      %377 = vst [vmem:[%s271 + $0x20] sm:$0xff] %v369
      %378 = vst [vmem:[%s271 + $0x28] sm:$0xff] %v370
      %379 = vst [vmem:[%s271 + $0x30] sm:$0xff] %v371
      %380 = vst [vmem:[%s271 + $0x38] sm:$0xff] %v372
      %s381 = smul.u32 2, %s20
      %p382 = scmp.lt.s32.totalorder %s19, 1
      %s383 = scalar_select %p382, %s19, 1
      %p384 = scmp.lt.s32.totalorder %s381, 1
      %s385 = scalar_select %p384, %s381, 1
      %s386 = smul.addr %s383, 8
      %s387 = sadd.s32 %s385, %s386
      %s388 = smul.addr %s387, 8
      %s389 = scalar_lea.vmem %s4, %s388
      // Predicated region
      $region37: #{bottleneckx_forward.7} parent=35 // pred_check
        %p390 = pneg %p145
      $region38: #{bottleneckx_forward.7} parent=35 // pred_check_branch
        %392 = sbr.rel (%p390) target = $region40
      $region39: #{bottleneckx_forward.7} parent=35 // pred_region
        %s393 = smul.u32 2, %s20
      $region40: #{bottleneckx_forward.7} parent=35 // pred_fallthru
        _
    $region36: #{bottleneckx_forward.7} parent=5 // pred_fallthru
      _
    %p394 = scmp.le.s32.totalorder 2, %s10
    // Predicated region
    $region41: #{bottleneckx_forward.7} parent=5 // pred_check
      %p395 = pneg %p394
    $region42: #{bottleneckx_forward.7} parent=5 // pred_check_branch
      %397 = sbr.rel (%p395) target = $region44
    $region43: #{bottleneckx_forward.7} parent=5 // pred_region
      %s398 = ssub.s32 %s10, 2
      // Predicated region
      $region45: #{bottleneckx_forward.7} parent=43 // pred_check
        %p399 = pneg %p151
      $region46: #{bottleneckx_forward.7} parent=43 // pred_check_branch
        %401 = sbr.rel (%p399) target = $region48
      $region47: #{bottleneckx_forward.7} parent=43 // pred_region
        %s402 = smul.u32 2, %s22
        %p403 = scmp.lt.s32.totalorder %s21, 1
        %s404 = scalar_select %p403, %s21, 1
        %p405 = scmp.lt.s32.totalorder %s402, 1
        %s406 = scalar_select %p405, %s402, 1
        %s407 = smul.addr %s404, 8
        %s408 = sadd.s32 %s406, %s407
        %s409 = smul.addr %s408, 8
        %s410 = scalar_lea.vmem %s4, %s409
      $region48: #{bottleneckx_forward.7} parent=43 // pred_fallthru
        _
    $region44: #{bottleneckx_forward.7} parent=5 // pred_fallthru
      _
  $region6: #{bottleneckx_forward.7} parent=0 // loop_footer
    %s14 = sadd.s32 1, %s10
  $region7: #{bottleneckx_forward.7} parent=0 // loop_footer_branch
    %9 = sbr.rel target = $region3
  $region8: #{bottleneckx_forward.7} parent=0 // loop_exit
    _

// kernel: bottleneckx_forward.5
$region0: #{bottleneckx_forward.5}
  #allocation0 [shape = 'u32[]', space=smem, size = 0x4, offset = 0x4, fixed_abs, tag = 'smem constant byte address 0x4 - core index']
  #allocation1 [shape = 'u32[144,128]{1,0:T(1,128)}', space=vmem, size = 0x12000, scoped, tag = 'internal scratch']
  %s0 = inlined_call_operand.vmem [shape: bf16[2,32,256], index: 0, kind: input, shape index: {}]
  %s1 = inlined_call_operand.vmem [shape: f32[32,1], index: 1, kind: input, shape index: {}]
  %s2 = inlined_call_operand.vmem [shape: f32[32,1], index: 2, kind: input, shape index: {}]
  %s3 = inlined_call_operand.vmem [shape: f32[32,9], index: 3, kind: input, shape index: {}]
  %s4 = inlined_call_operand.vmem [shape: f32[4,256], index: 4, kind: input, shape index: {}]
  %s5 = inlined_call_operand.vmem [shape: bf16[2,32,256], index: 5, kind: output, shape index: {0}]
  %s6 = inlined_call_operand.vmem [shape: f32[2,32,2], index: 6, kind: output, shape index: {1}]
  %7 = xla_tuple %s5, %s6
  %s8 = sld [smem:[#allocation0]]
  $region61: #{bottleneckx_forward.5} parent=0
    _
  %s10 = ssub.s32 1, %s8
  %s11 = scalar_select 0, %s10, %s8
  loop: start=0, step=1, limit=4
  $region2: #{bottleneckx_forward.5} parent=0 // loop_pre_header
    _
  $region3: #{bottleneckx_forward.5} parent=0 // loop_header
    %s13 = sphi 0, %s17
    %p14 = scmp.ge.s32.totalorder %s13, 4
    %s23 = sphi 0, %s25
    %s26 = sphi 0, %s23
    %s27 = sphi 0, %s26
    %s43 = sphi 0, %s27
    %s47 = sphi 0, %s47
    %s49 = sphi 0, %s47
    %s50 = sphi 0, %s49
    %s64 = sphi 0, %s50
    %s68 = sphi 0, %s68
    %s70 = sphi 0, %s68
    %s71 = sphi 0, %s70
    %s85 = sphi 0, %s71
    %s89 = sphi 0, %s89
    %s91 = sphi 0, %s89
    %s92 = sphi 0, %s91
    %s106 = sphi 0, %s92
    %s110 = sphi 0, %s110
    %s112 = sphi 0, %s110
    %s113 = sphi 0, %s112
    %s127 = sphi 0, %s113
    %s133 = sphi 0, %s135
    %s136 = sphi 0, %s133
    %s137 = sphi 0, %s136
    %s153 = sphi 0, %s137
    %s159 = sphi 0, %s161
    %s162 = sphi 0, %s159
    %s163 = sphi 0, %s162
    %s179 = sphi 0, %s163
  $region4: #{bottleneckx_forward.5} parent=0 // loop_header_branch
    %16 = sbr.rel (%p14) target = $region8
  $region5: #{bottleneckx_forward.5} parent=0 // loop_body
    %s18 = ssub.s32 %s13, 1
    %s19 = ssub.s32 %s13, 2
    %s20 = sadd.s32 %s13, 1
    %s21 = ssub.s32 %s13, %s20
    %p22 = scmp.eq.s32.totalorder %s21, 0
    %s24 = sadd.s32 %s23, 1
    %s25 = scalar_select %p22, %s23, %s24
    %p28 = pneg %p22
    %p29 = scmp.eq.s32.totalorder %s13, 1
    %p30 = por %p28, %p29
    %p31 = scmp.ne.s32.totalorder %s23, %s26
    %p32 = scmp.eq.s32.totalorder %s13, 0
    %p33 = por %p31, %p32
    %p34 = scmp.ne.s32.totalorder %s23, %s26
    %p35 = scmp.eq.s32.totalorder %s18, 1
    %p36 = por %p34, %p35
    %p37 = scmp.ne.s32.totalorder %s26, %s27
    %p38 = scmp.eq.s32.totalorder %s18, 0
    %p39 = por %p37, %p38
    %p40 = scmp.ne.s32.totalorder %s26, %s27
    %p41 = scmp.eq.s32.totalorder %s19, 1
    %p42 = por %p40, %p41
    %p44 = scmp.ne.s32.totalorder %s27, %s43
    %p45 = scmp.eq.s32.totalorder %s19, 0
    %p46 = por %p44, %p45
    %s48 = sadd.s32 %s47, 1
    %p51 = scmp.eq.s32.totalorder %s13, 1
    %p52 = scmp.ne.s32.totalorder %s47, %s49
    %p53 = scmp.eq.s32.totalorder %s13, 0
    %p54 = por %p52, %p53
    %p55 = scmp.ne.s32.totalorder %s47, %s49
    %p56 = scmp.eq.s32.totalorder %s18, 1
    %p57 = por %p55, %p56
    %p58 = scmp.ne.s32.totalorder %s49, %s50
    %p59 = scmp.eq.s32.totalorder %s18, 0
    %p60 = por %p58, %p59
    %p61 = scmp.ne.s32.totalorder %s49, %s50
    %p62 = scmp.eq.s32.totalorder %s19, 1
    %p63 = por %p61, %p62
    %p65 = scmp.ne.s32.totalorder %s50, %s64
    %p66 = scmp.eq.s32.totalorder %s19, 0
    %p67 = por %p65, %p66
    %s69 = sadd.s32 %s68, 1
    %p72 = scmp.eq.s32.totalorder %s13, 1
    %p73 = scmp.ne.s32.totalorder %s68, %s70
    %p74 = scmp.eq.s32.totalorder %s13, 0
    %p75 = por %p73, %p74
    %p76 = scmp.ne.s32.totalorder %s68, %s70
    %p77 = scmp.eq.s32.totalorder %s18, 1
    %p78 = por %p76, %p77
    %p79 = scmp.ne.s32.totalorder %s70, %s71
    %p80 = scmp.eq.s32.totalorder %s18, 0
    %p81 = por %p79, %p80
    %p82 = scmp.ne.s32.totalorder %s70, %s71
    %p83 = scmp.eq.s32.totalorder %s19, 1
    %p84 = por %p82, %p83
    %p86 = scmp.ne.s32.totalorder %s71, %s85
    %p87 = scmp.eq.s32.totalorder %s19, 0
    %p88 = por %p86, %p87
    %s90 = sadd.s32 %s89, 1
    %p93 = scmp.eq.s32.totalorder %s13, 1
    %p94 = scmp.ne.s32.totalorder %s89, %s91
    %p95 = scmp.eq.s32.totalorder %s13, 0
    %p96 = por %p94, %p95
    %p97 = scmp.ne.s32.totalorder %s89, %s91
    %p98 = scmp.eq.s32.totalorder %s18, 1
    %p99 = por %p97, %p98
    %p100 = scmp.ne.s32.totalorder %s91, %s92
    %p101 = scmp.eq.s32.totalorder %s18, 0
    %p102 = por %p100, %p101
    %p103 = scmp.ne.s32.totalorder %s91, %s92
    %p104 = scmp.eq.s32.totalorder %s19, 1
    %p105 = por %p103, %p104
    %p107 = scmp.ne.s32.totalorder %s92, %s106
    %p108 = scmp.eq.s32.totalorder %s19, 0
    %p109 = por %p107, %p108
    %s111 = sadd.s32 %s110, 1
    %p114 = scmp.eq.s32.totalorder %s13, 1
    %p115 = scmp.ne.s32.totalorder %s110, %s112
    %p116 = scmp.eq.s32.totalorder %s13, 0
    %p117 = por %p115, %p116
    %p118 = scmp.ne.s32.totalorder %s110, %s112
    %p119 = scmp.eq.s32.totalorder %s18, 1
    %p120 = por %p118, %p119
    %p121 = scmp.ne.s32.totalorder %s112, %s113
    %p122 = scmp.eq.s32.totalorder %s18, 0
    %p123 = por %p121, %p122
    %p124 = scmp.ne.s32.totalorder %s112, %s113
    %p125 = scmp.eq.s32.totalorder %s19, 1
    %p126 = por %p124, %p125
    %p128 = scmp.ne.s32.totalorder %s113, %s127
    %p129 = scmp.eq.s32.totalorder %s19, 0
    %p130 = por %p128, %p129
    %s131 = ssub.s32 %s13, %s20
    %p132 = scmp.eq.s32.totalorder %s131, 0
    %s134 = sadd.s32 %s133, 1
    %s135 = scalar_select %p132, %s133, %s134
    %p138 = pneg %p132
    %p139 = scmp.eq.s32.totalorder %s13, 1
    %p140 = por %p138, %p139
    %p141 = scmp.ne.s32.totalorder %s133, %s136
    %p142 = scmp.eq.s32.totalorder %s13, 0
    %p143 = por %p141, %p142
    %p144 = scmp.ne.s32.totalorder %s133, %s136
    %p145 = scmp.eq.s32.totalorder %s18, 1
    %p146 = por %p144, %p145
    %p147 = scmp.ne.s32.totalorder %s136, %s137
    %p148 = scmp.eq.s32.totalorder %s18, 0
    %p149 = por %p147, %p148
    %p150 = scmp.ne.s32.totalorder %s136, %s137
    %p151 = scmp.eq.s32.totalorder %s19, 1
    %p152 = por %p150, %p151
    %p154 = scmp.ne.s32.totalorder %s137, %s153
    %p155 = scmp.eq.s32.totalorder %s19, 0
    %p156 = por %p154, %p155
    %s157 = ssub.s32 %s13, %s20
    %p158 = scmp.eq.s32.totalorder %s157, 0
    %s160 = sadd.s32 %s159, 1
    %s161 = scalar_select %p158, %s159, %s160
    %p164 = pneg %p158
    %p165 = scmp.eq.s32.totalorder %s13, 1
    %p166 = por %p164, %p165
    %p167 = scmp.ne.s32.totalorder %s159, %s162
    %p168 = scmp.eq.s32.totalorder %s13, 0
    %p169 = por %p167, %p168
    %p170 = scmp.ne.s32.totalorder %s159, %s162
    %p171 = scmp.eq.s32.totalorder %s18, 1
    %p172 = por %p170, %p171
    %p173 = scmp.ne.s32.totalorder %s162, %s163
    %p174 = scmp.eq.s32.totalorder %s18, 0
    %p175 = por %p173, %p174
    %p176 = scmp.ne.s32.totalorder %s162, %s163
    %p177 = scmp.eq.s32.totalorder %s19, 1
    %p178 = por %p176, %p177
    %p180 = scmp.ne.s32.totalorder %s163, %s179
    %p181 = scmp.eq.s32.totalorder %s19, 0
    %p182 = por %p180, %p181
    %p183 = scmp.le.s32.totalorder 1, %s13
    %p184 = scmp.lt.s32.totalorder %s13, 3
    %p185 = pnand %p183, %p184
    %p186 = pneg %p185
    // Predicated region
    $region9: #{bottleneckx_forward.5} parent=5 // pred_check
      _
    $region10: #{bottleneckx_forward.5} parent=5 // pred_check_branch
      %188 = sbr.rel (%p185) target = $region12
    $region11: #{bottleneckx_forward.5} parent=5 // pred_region
      %s189 = ssub.s32 %s13, 1
      // Predicated region
      $region13: #{bottleneckx_forward.5} parent=11 // pred_check
        %p190 = pneg %p60
      $region14: #{bottleneckx_forward.5} parent=11 // pred_check_branch
        %192 = sbr.rel (%p190) target = $region16
      $region15: #{bottleneckx_forward.5} parent=11 // pred_region
        _
      $region16: #{bottleneckx_forward.5} parent=11 // pred_fallthru
        _
      // Predicated region
      $region17: #{bottleneckx_forward.5} parent=11 // pred_check
        %p193 = pneg %p81
      $region18: #{bottleneckx_forward.5} parent=11 // pred_check_branch
        %195 = sbr.rel (%p193) target = $region20
      $region19: #{bottleneckx_forward.5} parent=11 // pred_region
        _
      $region20: #{bottleneckx_forward.5} parent=11 // pred_fallthru
        _
      // Predicated region
      $region21: #{bottleneckx_forward.5} parent=11 // pred_check
        %p196 = pneg %p102
      $region22: #{bottleneckx_forward.5} parent=11 // pred_check_branch
        %198 = sbr.rel (%p196) target = $region24
      $region23: #{bottleneckx_forward.5} parent=11 // pred_region
        _
      $region24: #{bottleneckx_forward.5} parent=11 // pred_fallthru
        _
      // Predicated region
      $region25: #{bottleneckx_forward.5} parent=11 // pred_check
        %p199 = pneg %p123
      $region26: #{bottleneckx_forward.5} parent=11 // pred_check_branch
        %201 = sbr.rel (%p199) target = $region28
      $region27: #{bottleneckx_forward.5} parent=11 // pred_region
        _
      $region28: #{bottleneckx_forward.5} parent=11 // pred_fallthru
        _
    $region12: #{bottleneckx_forward.5} parent=5 // pred_fallthru
      _
    %p202 = scmp.lt.s32.totalorder %s13, 2
    // Predicated region
    $region29: #{bottleneckx_forward.5} parent=5 // pred_check
      %p203 = pneg %p202
    $region30: #{bottleneckx_forward.5} parent=5 // pred_check_branch
      %205 = sbr.rel (%p203) target = $region32
    $region31: #{bottleneckx_forward.5} parent=5 // pred_region
      // Predicated region
      $region33: #{bottleneckx_forward.5} parent=31 // pred_check
        %p206 = pneg %p33
      $region34: #{bottleneckx_forward.5} parent=31 // pred_check_branch
        %208 = sbr.rel (%p206) target = $region36
      $region35: #{bottleneckx_forward.5} parent=31 // pred_region
        %p209 = scmp.lt.s32.totalorder %s13, 1
        %s210 = scalar_select %p209, %s13, 1
        %s211 = smul.addr %s210, 8
        %s212 = smul.addr %s211, 4
        %s213 = scalar_lea.vmem %s0, %s212
      $region36: #{bottleneckx_forward.5} parent=31 // pred_fallthru
        _
    $region32: #{bottleneckx_forward.5} parent=5 // pred_fallthru
      _
    %p214 = scmp.le.s32.totalorder 1, %s13
    %p215 = scmp.lt.s32.totalorder %s13, 3
    %p216 = pnand %p214, %p215
    %p217 = pneg %p216
    // Predicated region
    $region37: #{bottleneckx_forward.5} parent=5 // pred_check
      _
    $region38: #{bottleneckx_forward.5} parent=5 // pred_check_branch
      %219 = sbr.rel (%p216) target = $region40
    $region39: #{bottleneckx_forward.5} parent=5 // pred_region
      %s220 = ssub.s32 %s13, 1
      %p221 = scmp.lt.s32.totalorder %s18, 1
      %s222 = scalar_select %p221, %s18, 1
      %s223 = smul.addr %s222, 8
      %s224 = smul.addr %s223, 4
      %s225 = scalar_lea.vmem %s0, %s224
      %p226 = pneg %p39
      %p227 = pneg %p36
      %p228 = pneg %p60
      %p229 = pneg %p57
      %p230 = pneg %p81
      %p231 = pneg %p78
      %p232 = pneg %p102
      %p233 = pneg %p99
      %p234 = pneg %p123
      %p235 = pneg %p120
      %p236 = pneg %p149
      %p237 = pneg %p146
      %p238 = scmp.lt.s32.totalorder %s18, 1
      %s239 = scalar_select %p238, %s18, 1
      %s240 = smul.addr %s239, 8
      %s241 = smul.addr %s240, 4
      %s242 = scalar_lea.vmem %s5, %s241
      %p243 = pneg %p175
      %p244 = pneg %p172
      %p245 = scmp.lt.s32.totalorder %s18, 1
      %s246 = scalar_select %p245, %s18, 1
      %s247 = smul.addr %s246, 4
      %s248 = smul.addr %s247, 8
      %s249 = scalar_lea.vmem %s6, %s248
      %p250 = scmp.lt.s32.totalorder %s18, 1
      %s251 = scalar_select %p250, %s18, 1
      %s252 = smul.addr %s251, 8
      %s253 = smul.addr %s252, 4
      %s254 = scalar_lea.vmem %s0, %s253
      %p255 = scmp.lt.s32.totalorder %s18, 1
      %s256 = scalar_select %p255, %s18, 1
      %s257 = smul.addr %s256, 8
      %s258 = smul.addr %s257, 4
      %s259 = scalar_lea.vmem %s5, %s258
      %p260 = scmp.lt.s32.totalorder %s18, 1
      %s261 = scalar_select %p260, %s18, 1
      %s262 = smul.addr %s261, 4
      %s263 = smul.addr %s262, 8
      %s264 = scalar_lea.vmem %s6, %s263
      %v265 = vld [vmem:[%s254] sm:$0xff]
      %v266 = vld [vmem:[%s254 + $0x8] sm:$0xff]
      %v267 = vld [vmem:[%s254 + $0x10] sm:$0xff]
      %v268 = vld [vmem:[%s254 + $0x18] sm:$0xff]
      %v269 = vunpack.c.l.bf16 %v265
      %v270 = vunpack.c.h.bf16 %v265
      %v271 = vunpack.c.l.bf16 %v266
      %v272 = vunpack.c.h.bf16 %v266
      %v273 = vunpack.c.l.bf16 %v267
      %v274 = vunpack.c.h.bf16 %v267
      %v275 = vunpack.c.l.bf16 %v268
      %v276 = vunpack.c.h.bf16 %v268
      %v277 = vld [vmem:[%s1] sm:$0xff]
      %v278 = vld [vmem:[%s1 + $0x8] sm:$0xff]
      %v279 = vld [vmem:[%s1 + $0x10] sm:$0xff]
      %v280 = vld [vmem:[%s1 + $0x18] sm:$0xff]
      %282 = vset.pattern.permute.xlu0 0
      %283 = vperm.xlu0 %282, %v277
      %v284 = vpop.permute.xlu0 %283
      %287 = vset.pattern.permute.xlu0 0
      %288 = vperm.xlu0 %287, %v278
      %v289 = vpop.permute.xlu0 %288
      %292 = vset.pattern.permute.xlu0 0
      %293 = vperm.xlu0 %292, %v279
      %v294 = vpop.permute.xlu0 %293
      %297 = vset.pattern.permute.xlu0 0
      %298 = vperm.xlu0 %297, %v280
      %v299 = vpop.permute.xlu0 %298
      %v301 = vmul.f32 %v269, %v284
      %v302 = vmul.f32 %v270, %v284
      %v303 = vmul.f32 %v271, %v289
      %v304 = vmul.f32 %v272, %v289
      %v305 = vmul.f32 %v273, %v294
      %v306 = vmul.f32 %v274, %v294
      %v307 = vmul.f32 %v275, %v299
      %v308 = vmul.f32 %v276, %v299
      %v309 = vld [vmem:[%s2] sm:$0xff]
      %v310 = vld [vmem:[%s2 + $0x8] sm:$0xff]
      %v311 = vld [vmem:[%s2 + $0x10] sm:$0xff]
      %v312 = vld [vmem:[%s2 + $0x18] sm:$0xff]
      %314 = vset.pattern.permute.xlu0 0
      %315 = vperm.xlu0 %314, %v309
      %v316 = vpop.permute.xlu0 %315
      %319 = vset.pattern.permute.xlu0 0
      %320 = vperm.xlu0 %319, %v310
      %v321 = vpop.permute.xlu0 %320
      %324 = vset.pattern.permute.xlu0 0
      %325 = vperm.xlu0 %324, %v311
      %v326 = vpop.permute.xlu0 %325
      %329 = vset.pattern.permute.xlu0 0
      %330 = vperm.xlu0 %329, %v312
      %v331 = vpop.permute.xlu0 %330
      %v333 = vadd.f32 %v301, %v316
      %v334 = vadd.f32 %v302, %v316
      %v335 = vadd.f32 %v303, %v321
      %v336 = vadd.f32 %v304, %v321
      %v337 = vadd.f32 %v305, %v326
      %v338 = vadd.f32 %v306, %v326
      %v339 = vadd.f32 %v307, %v331
      %v340 = vadd.f32 %v308, %v331
      %v341 = vmax.f32 %v333, 0.0
      %v342 = vmax.f32 %v334, 0.0
      %v343 = vmax.f32 %v335, 0.0
      %v344 = vmax.f32 %v336, 0.0
      %v345 = vmax.f32 %v337, 0.0
      %v346 = vmax.f32 %v338, 0.0
      %v347 = vmax.f32 %v339, 0.0
      %v348 = vmax.f32 %v340, 0.0
      %v349 = vld [vmem:[%s3] sm:$0xff]
      %v350 = vld [vmem:[%s3 + $0x8] sm:$0xff]
      %v351 = vld [vmem:[%s3 + $0x10] sm:$0xff]
      %v352 = vld [vmem:[%s3 + $0x18] sm:$0xff]
      %v353 = vld [vmem:[%s4] sm:$0xff]
      %354 = vrot.lane.b32.xlu0 %v341, 1
      %v355 = vpop.permute.xlu0 %354
      %356 = vrot.lane.b32.xlu0 %v343, 1
      %v357 = vpop.permute.xlu0 %356
      %358 = vrot.lane.b32.xlu0 %v345, 1
      %v359 = vpop.permute.xlu0 %358
      %360 = vrot.lane.b32.xlu0 %v347, 1
      %v361 = vpop.permute.xlu0 %360
      %362 = vrot.lane.b32.xlu0 %v342, 1
      %v363 = vpop.permute.xlu0 %362
      %364 = vrot.lane.b32.xlu0 %v344, 1
      %v365 = vpop.permute.xlu0 %364
      %366 = vrot.lane.b32.xlu0 %v346, 1
      %v367 = vpop.permute.xlu0 %366
      %368 = vrot.lane.b32.xlu0 %v348, 1
      %v369 = vpop.permute.xlu0 %368
      %v370 = vlaneseq
      %v371 = vand.u32 %v370, 127
      %vm372 = vcmp.lt.s32.totalorder %v371, 1
      %v373 = vsel %vm372, %v355, %v363
      %v374 = vsel %vm372, %v357, %v365
      %v375 = vsel %vm372, %v359, %v367
      %v376 = vsel %vm372, %v361, %v369
      %v377 = vsel %vm372, %v363, %v355
      %v378 = vsel %vm372, %v365, %v357
      %v379 = vsel %vm372, %v367, %v359
      %v380 = vsel %vm372, %v369, %v361
      %v382 = vlaneseq
      %v383 = vshrl.u32 %v382, 7
      %v384 = vsub.s32 0, %v383
      %v385 = vrot.slane %v353, %v384
      %v386 = vlaneseq
      %v387 = vshrl.u32 %v386, 7
      %v388 = vsub.s32 4, %v387
      %v389 = vrot.slane %v353, %v388
      %v392 = vlaneseq
      %v393 = vshrl.u32 %v392, 7
      %v394 = vsub.s32 0, %v393
      %v395 = vrot.slane %v385, %v394
      %v396 = vlaneseq
      %v397 = vshrl.u32 %v396, 7
      %v398 = vsub.s32 0, %v397
      %v399 = vrot.slane %v389, %v398
      %v400 = vmul.f32 %v377, %v395
      %v401 = vmul.f32 %v373, %v399
      %v402 = vmul.f32 %v378, %v395
      %v403 = vmul.f32 %v374, %v399
      %v404 = vmul.f32 %v379, %v395
      %v405 = vmul.f32 %v375, %v399
      %v406 = vmul.f32 %v380, %v395
      %v407 = vmul.f32 %v376, %v399
      %408 = vrot.lane.b32.xlu0 %v341, 127
      %v409 = vpop.permute.xlu0 %408
      %410 = vrot.lane.b32.xlu0 %v343, 127
      %v411 = vpop.permute.xlu0 %410
      %412 = vrot.lane.b32.xlu0 %v345, 127
      %v413 = vpop.permute.xlu0 %412
      %414 = vrot.lane.b32.xlu0 %v347, 127
      %v415 = vpop.permute.xlu0 %414
      %416 = vrot.lane.b32.xlu0 %v342, 127
      %v417 = vpop.permute.xlu0 %416
      %418 = vrot.lane.b32.xlu0 %v344, 127
      %v419 = vpop.permute.xlu0 %418
      %420 = vrot.lane.b32.xlu0 %v346, 127
      %v421 = vpop.permute.xlu0 %420
      %422 = vrot.lane.b32.xlu0 %v348, 127
      %v423 = vpop.permute.xlu0 %422
      %vm424 = vcmp.lt.s32.totalorder %v371, 127
      %v425 = vsel %vm424, %v409, %v417
      %v426 = vsel %vm424, %v411, %v419
      %v427 = vsel %vm424, %v413, %v421
      %v428 = vsel %vm424, %v415, %v423
      %v429 = vsel %vm424, %v417, %v409
      %v430 = vsel %vm424, %v419, %v411
      %v431 = vsel %vm424, %v421, %v413
      %v432 = vsel %vm424, %v423, %v415
      %v433 = vlaneseq
      %v434 = vshrl.u32 %v433, 7
      %v435 = vsub.s32 1, %v434
      %v436 = vrot.slane %v353, %v435
      %v437 = vlaneseq
      %v438 = vshrl.u32 %v437, 7
      %v439 = vsub.s32 5, %v438
      %v440 = vrot.slane %v353, %v439
      %v443 = vlaneseq
      %v444 = vshrl.u32 %v443, 7
      %v445 = vsub.s32 1, %v444
      %v446 = vrot.slane %v436, %v445
      %v447 = vlaneseq
      %v448 = vshrl.u32 %v447, 7
      %v449 = vsub.s32 1, %v448
      %v450 = vrot.slane %v440, %v449
      %v451 = vmul.f32 %v425, %v446
      %v452 = vmul.f32 %v429, %v450
      %v453 = vmul.f32 %v426, %v446
      %v454 = vmul.f32 %v430, %v450
      %v455 = vmul.f32 %v427, %v446
      %v456 = vmul.f32 %v431, %v450
      %v457 = vmul.f32 %v428, %v446
      %v458 = vmul.f32 %v432, %v450
      %460 = vset.pattern.permute.xlu0 3
      %461 = vperm.xlu0 %460, %v349
      %v462 = vpop.permute.xlu0 %461
      %465 = vset.pattern.permute.xlu0 3
      %466 = vperm.xlu0 %465, %v350
      %v467 = vpop.permute.xlu0 %466
      %470 = vset.pattern.permute.xlu0 3
      %471 = vperm.xlu0 %470, %v351
      %v472 = vpop.permute.xlu0 %471
      %475 = vset.pattern.permute.xlu0 3
      %476 = vperm.xlu0 %475, %v352
      %v477 = vpop.permute.xlu0 %476
      %v479 = vmul.f32 %v400, %v462
      %v480 = vmul.f32 %v401, %v462
      %v481 = vmul.f32 %v402, %v467
      %v482 = vmul.f32 %v403, %v467
      %v483 = vmul.f32 %v404, %v472
      %v484 = vmul.f32 %v405, %v472
      %v485 = vmul.f32 %v406, %v477
      %v486 = vmul.f32 %v407, %v477
      %487 = vset.pattern.permute.xlu0 4
      %488 = vperm.xlu0 %487, %v349
      %v489 = vpop.permute.xlu0 %488
      %491 = vset.pattern.permute.xlu0 4
      %492 = vperm.xlu0 %491, %v350
      %v493 = vpop.permute.xlu0 %492
      %495 = vset.pattern.permute.xlu0 4
      %496 = vperm.xlu0 %495, %v351
      %v497 = vpop.permute.xlu0 %496
      %499 = vset.pattern.permute.xlu0 4
      %500 = vperm.xlu0 %499, %v352
      %v501 = vpop.permute.xlu0 %500
      %v503 = vmul.f32 %v341, %v489
      %v504 = vmul.f32 %v342, %v489
      %v505 = vmul.f32 %v343, %v493
      %v506 = vmul.f32 %v344, %v493
      %v507 = vmul.f32 %v345, %v497
      %v508 = vmul.f32 %v346, %v497
      %v509 = vmul.f32 %v347, %v501
      %v510 = vmul.f32 %v348, %v501
      %v511 = vadd.f32 %v479, %v503
      %v512 = vadd.f32 %v480, %v504
      %v513 = vadd.f32 %v481, %v505
      %v514 = vadd.f32 %v482, %v506
      %v515 = vadd.f32 %v483, %v507
      %v516 = vadd.f32 %v484, %v508
      %v517 = vadd.f32 %v485, %v509
      %v518 = vadd.f32 %v486, %v510
      %519 = vset.pattern.permute.xlu0 5
      %520 = vperm.xlu0 %519, %v349
      %v521 = vpop.permute.xlu0 %520
      %523 = vset.pattern.permute.xlu0 5
      %524 = vperm.xlu0 %523, %v350
      %v525 = vpop.permute.xlu0 %524
      %527 = vset.pattern.permute.xlu0 5
      %528 = vperm.xlu0 %527, %v351
      %v529 = vpop.permute.xlu0 %528
      %531 = vset.pattern.permute.xlu0 5
      %532 = vperm.xlu0 %531, %v352
      %v533 = vpop.permute.xlu0 %532
      %v535 = vmul.f32 %v451, %v521
      %v536 = vmul.f32 %v452, %v521
      %v537 = vmul.f32 %v453, %v525
      %v538 = vmul.f32 %v454, %v525
      %v539 = vmul.f32 %v455, %v529
      %v540 = vmul.f32 %v456, %v529
      %v541 = vmul.f32 %v457, %v533
      %v542 = vmul.f32 %v458, %v533
      %v543 = vadd.f32 %v511, %v535
      %v544 = vadd.f32 %v512, %v536
      %v545 = vadd.f32 %v513, %v537
      %v546 = vadd.f32 %v514, %v538
      %v547 = vadd.f32 %v515, %v539
      %v548 = vadd.f32 %v516, %v540
      %v549 = vadd.f32 %v517, %v541
      %v550 = vadd.f32 %v518, %v542
      %551 = vrot.lane.b32.xlu0 %v400, 16
      %v552 = vpop.permute.xlu0 %551
      %553 = vrot.lane.b32.xlu0 %v402, 16
      %v554 = vpop.permute.xlu0 %553
      %555 = vrot.lane.b32.xlu0 %v404, 16
      %v556 = vpop.permute.xlu0 %555
      %557 = vrot.lane.b32.xlu0 %v406, 16
      %v558 = vpop.permute.xlu0 %557
      %559 = vrot.lane.b32.xlu0 %v401, 16
      %v560 = vpop.permute.xlu0 %559
      %561 = vrot.lane.b32.xlu0 %v403, 16
      %v562 = vpop.permute.xlu0 %561
      %563 = vrot.lane.b32.xlu0 %v405, 16
      %v564 = vpop.permute.xlu0 %563
      %565 = vrot.lane.b32.xlu0 %v407, 16
      %v566 = vpop.permute.xlu0 %565
      %vm567 = vcmp.lt.s32.totalorder %v371, 16
      %v568 = vsel %vm567, %v552, %v560
      %v569 = vsel %vm567, %v554, %v562
      %v570 = vsel %vm567, %v556, %v564
      %v571 = vsel %vm567, %v558, %v566
      %v572 = vsel %vm567, %v560, %v552
      %v573 = vsel %vm567, %v562, %v554
      %v574 = vsel %vm567, %v564, %v556
      %v575 = vsel %vm567, %v566, %v558
      %576 = vset.pattern.permute.xlu0 0
      %577 = vperm.xlu0 %576, %v349
      %v578 = vpop.permute.xlu0 %577
      %580 = vset.pattern.permute.xlu0 0
      %581 = vperm.xlu0 %580, %v350
      %v582 = vpop.permute.xlu0 %581
      %584 = vset.pattern.permute.xlu0 0
      %585 = vperm.xlu0 %584, %v351
      %v586 = vpop.permute.xlu0 %585
      %588 = vset.pattern.permute.xlu0 0
      %589 = vperm.xlu0 %588, %v352
      %v590 = vpop.permute.xlu0 %589
      %v592 = vmul.f32 %v572, %v578
      %v593 = vmul.f32 %v568, %v578
      %v594 = vmul.f32 %v573, %v582
      %v595 = vmul.f32 %v569, %v582
      %v596 = vmul.f32 %v574, %v586
      %v597 = vmul.f32 %v570, %v586
      %v598 = vmul.f32 %v575, %v590
      %v599 = vmul.f32 %v571, %v590
      %600 = vrot.lane.b32.xlu0 %v341, 16
      %v601 = vpop.permute.xlu0 %600
      %602 = vrot.lane.b32.xlu0 %v343, 16
      %v603 = vpop.permute.xlu0 %602
      %604 = vrot.lane.b32.xlu0 %v345, 16
      %v605 = vpop.permute.xlu0 %604
      %606 = vrot.lane.b32.xlu0 %v347, 16
      %v607 = vpop.permute.xlu0 %606
      %608 = vrot.lane.b32.xlu0 %v342, 16
      %v609 = vpop.permute.xlu0 %608
      %610 = vrot.lane.b32.xlu0 %v344, 16
      %v611 = vpop.permute.xlu0 %610
      %612 = vrot.lane.b32.xlu0 %v346, 16
      %v613 = vpop.permute.xlu0 %612
      %614 = vrot.lane.b32.xlu0 %v348, 16
      %v615 = vpop.permute.xlu0 %614
      %v616 = vsel %vm567, %v601, %v609
      %v617 = vsel %vm567, %v603, %v611
      %v618 = vsel %vm567, %v605, %v613
      %v619 = vsel %vm567, %v607, %v615
      %v620 = vsel %vm567, %v609, %v601
      %v621 = vsel %vm567, %v611, %v603
      %v622 = vsel %vm567, %v613, %v605
      %v623 = vsel %vm567, %v615, %v607
      %624 = vset.pattern.permute.xlu0 1
      %625 = vperm.xlu0 %624, %v349
      %v626 = vpop.permute.xlu0 %625
      %628 = vset.pattern.permute.xlu0 1
      %629 = vperm.xlu0 %628, %v350
      %v630 = vpop.permute.xlu0 %629
      %632 = vset.pattern.permute.xlu0 1
      %633 = vperm.xlu0 %632, %v351
      %v634 = vpop.permute.xlu0 %633
      %636 = vset.pattern.permute.xlu0 1
      %637 = vperm.xlu0 %636, %v352
      %v638 = vpop.permute.xlu0 %637
      %v640 = vmul.f32 %v620, %v626
      %v641 = vmul.f32 %v616, %v626
      %v642 = vmul.f32 %v621, %v630
      %v643 = vmul.f32 %v617, %v630
      %v644 = vmul.f32 %v622, %v634
      %v645 = vmul.f32 %v618, %v634
      %v646 = vmul.f32 %v623, %v638
      %v647 = vmul.f32 %v619, %v638
      %v648 = vadd.f32 %v592, %v640
      %v649 = vadd.f32 %v593, %v641
      %v650 = vadd.f32 %v594, %v642
      %v651 = vadd.f32 %v595, %v643
      %v652 = vadd.f32 %v596, %v644
      %v653 = vadd.f32 %v597, %v645
      %v654 = vadd.f32 %v598, %v646
      %v655 = vadd.f32 %v599, %v647
      %656 = vrot.lane.b32.xlu0 %v451, 16
      %v657 = vpop.permute.xlu0 %656
      %658 = vrot.lane.b32.xlu0 %v453, 16
      %v659 = vpop.permute.xlu0 %658
      %660 = vrot.lane.b32.xlu0 %v455, 16
      %v661 = vpop.permute.xlu0 %660
      %662 = vrot.lane.b32.xlu0 %v457, 16
      %v663 = vpop.permute.xlu0 %662
      %664 = vrot.lane.b32.xlu0 %v452, 16
      %v665 = vpop.permute.xlu0 %664
      %666 = vrot.lane.b32.xlu0 %v454, 16
      %v667 = vpop.permute.xlu0 %666
      %668 = vrot.lane.b32.xlu0 %v456, 16
      %v669 = vpop.permute.xlu0 %668
      %670 = vrot.lane.b32.xlu0 %v458, 16
      %v671 = vpop.permute.xlu0 %670
      %v672 = vsel %vm567, %v657, %v665
      %v673 = vsel %vm567, %v659, %v667
      %v674 = vsel %vm567, %v661, %v669
      %v675 = vsel %vm567, %v663, %v671
      %v676 = vsel %vm567, %v665, %v657
      %v677 = vsel %vm567, %v667, %v659
      %v678 = vsel %vm567, %v669, %v661
      %v679 = vsel %vm567, %v671, %v663
      %680 = vset.pattern.permute.xlu0 2
      %681 = vperm.xlu0 %680, %v349
      %v682 = vpop.permute.xlu0 %681
      %684 = vset.pattern.permute.xlu0 2
      %685 = vperm.xlu0 %684, %v350
      %v686 = vpop.permute.xlu0 %685
      %688 = vset.pattern.permute.xlu0 2
      %689 = vperm.xlu0 %688, %v351
      %v690 = vpop.permute.xlu0 %689
      %692 = vset.pattern.permute.xlu0 2
      %693 = vperm.xlu0 %692, %v352
      %v694 = vpop.permute.xlu0 %693
      %v696 = vmul.f32 %v676, %v682
      %v697 = vmul.f32 %v672, %v682
      %v698 = vmul.f32 %v677, %v686
      %v699 = vmul.f32 %v673, %v686
      %v700 = vmul.f32 %v678, %v690
      %v701 = vmul.f32 %v674, %v690
      %v702 = vmul.f32 %v679, %v694
      %v703 = vmul.f32 %v675, %v694
      %v704 = vadd.f32 %v648, %v696
      %v705 = vadd.f32 %v649, %v697
      %v706 = vadd.f32 %v650, %v698
      %v707 = vadd.f32 %v651, %v699
      %v708 = vadd.f32 %v652, %v700
      %v709 = vadd.f32 %v653, %v701
      %v710 = vadd.f32 %v654, %v702
      %v711 = vadd.f32 %v655, %v703
      %v712 = vlaneseq
      %v713 = vshrl.u32 %v712, 7
      %v714 = vsub.s32 2, %v713
      %v715 = vrot.slane %v353, %v714
      %v716 = vlaneseq
      %v717 = vshrl.u32 %v716, 7
      %v718 = vsub.s32 6, %v717
      %v719 = vrot.slane %v353, %v718
      %v722 = vlaneseq
      %v723 = vshrl.u32 %v722, 7
      %v724 = vsub.s32 2, %v723
      %v725 = vrot.slane %v715, %v724
      %v726 = vlaneseq
      %v727 = vshrl.u32 %v726, 7
      %v728 = vsub.s32 2, %v727
      %v729 = vrot.slane %v719, %v728
      %v730 = vmul.f32 %v704, %v725
      %v731 = vmul.f32 %v705, %v729
      %v732 = vmul.f32 %v706, %v725
      %v733 = vmul.f32 %v707, %v729
      %v734 = vmul.f32 %v708, %v725
      %v735 = vmul.f32 %v709, %v729
      %v736 = vmul.f32 %v710, %v725
      %v737 = vmul.f32 %v711, %v729
      %v738 = vadd.f32 %v543, %v730
      %v739 = vadd.f32 %v544, %v731
      %v740 = vadd.f32 %v545, %v732
      %v741 = vadd.f32 %v546, %v733
      %v742 = vadd.f32 %v547, %v734
      %v743 = vadd.f32 %v548, %v735
      %v744 = vadd.f32 %v549, %v736
      %v745 = vadd.f32 %v550, %v737
      %746 = vrot.lane.b32.xlu0 %v400, 112
      %v747 = vpop.permute.xlu0 %746
      %748 = vrot.lane.b32.xlu0 %v402, 112
      %v749 = vpop.permute.xlu0 %748
      %750 = vrot.lane.b32.xlu0 %v404, 112
      %v751 = vpop.permute.xlu0 %750
      %752 = vrot.lane.b32.xlu0 %v406, 112
      %v753 = vpop.permute.xlu0 %752
      %754 = vrot.lane.b32.xlu0 %v401, 112
      %v755 = vpop.permute.xlu0 %754
      %756 = vrot.lane.b32.xlu0 %v403, 112
      %v757 = vpop.permute.xlu0 %756
      %758 = vrot.lane.b32.xlu0 %v405, 112
      %v759 = vpop.permute.xlu0 %758
      %760 = vrot.lane.b32.xlu0 %v407, 112
      %v761 = vpop.permute.xlu0 %760
      %vm762 = vcmp.lt.s32.totalorder %v371, 112
      %v763 = vsel %vm762, %v747, %v755
      %v764 = vsel %vm762, %v749, %v757
      %v765 = vsel %vm762, %v751, %v759
      %v766 = vsel %vm762, %v753, %v761
      %v767 = vsel %vm762, %v755, %v747
      %v768 = vsel %vm762, %v757, %v749
      %v769 = vsel %vm762, %v759, %v751
      %v770 = vsel %vm762, %v761, %v753
      %771 = vset.pattern.permute.xlu0 6
      %772 = vperm.xlu0 %771, %v349
      %v773 = vpop.permute.xlu0 %772
      %775 = vset.pattern.permute.xlu0 6
      %776 = vperm.xlu0 %775, %v350
      %v777 = vpop.permute.xlu0 %776
      %779 = vset.pattern.permute.xlu0 6
      %780 = vperm.xlu0 %779, %v351
      %v781 = vpop.permute.xlu0 %780
      %783 = vset.pattern.permute.xlu0 6
      %784 = vperm.xlu0 %783, %v352
      %v785 = vpop.permute.xlu0 %784
      %v787 = vmul.f32 %v763, %v773
      %v788 = vmul.f32 %v767, %v773
      %v789 = vmul.f32 %v764, %v777
      %v790 = vmul.f32 %v768, %v777
      %v791 = vmul.f32 %v765, %v781
      %v792 = vmul.f32 %v769, %v781
      %v793 = vmul.f32 %v766, %v785
      %v794 = vmul.f32 %v770, %v785
      %795 = vrot.lane.b32.xlu0 %v341, 112
      %v796 = vpop.permute.xlu0 %795
      %797 = vrot.lane.b32.xlu0 %v343, 112
      %v798 = vpop.permute.xlu0 %797
      %799 = vrot.lane.b32.xlu0 %v345, 112
      %v800 = vpop.permute.xlu0 %799
      %801 = vrot.lane.b32.xlu0 %v347, 112
      %v802 = vpop.permute.xlu0 %801
      %803 = vrot.lane.b32.xlu0 %v342, 112
      %v804 = vpop.permute.xlu0 %803
      %805 = vrot.lane.b32.xlu0 %v344, 112
      %v806 = vpop.permute.xlu0 %805
      %807 = vrot.lane.b32.xlu0 %v346, 112
      %v808 = vpop.permute.xlu0 %807
      %809 = vrot.lane.b32.xlu0 %v348, 112
      %v810 = vpop.permute.xlu0 %809
      %v811 = vsel %vm762, %v796, %v804
      %v812 = vsel %vm762, %v798, %v806
      %v813 = vsel %vm762, %v800, %v808
      %v814 = vsel %vm762, %v802, %v810
      %v815 = vsel %vm762, %v804, %v796
      %v816 = vsel %vm762, %v806, %v798
      %v817 = vsel %vm762, %v808, %v800
      %v818 = vsel %vm762, %v810, %v802
      %819 = vset.pattern.permute.xlu0 7
      %820 = vperm.xlu0 %819, %v349
      %v821 = vpop.permute.xlu0 %820
      %823 = vset.pattern.permute.xlu0 7
      %824 = vperm.xlu0 %823, %v350
      %v825 = vpop.permute.xlu0 %824
      %827 = vset.pattern.permute.xlu0 7
      %828 = vperm.xlu0 %827, %v351
      %v829 = vpop.permute.xlu0 %828
      %831 = vset.pattern.permute.xlu0 7
      %832 = vperm.xlu0 %831, %v352
      %v833 = vpop.permute.xlu0 %832
      %v835 = vmul.f32 %v811, %v821
      %v836 = vmul.f32 %v815, %v821
      %v837 = vmul.f32 %v812, %v825
      %v838 = vmul.f32 %v816, %v825
      %v839 = vmul.f32 %v813, %v829
      %v840 = vmul.f32 %v817, %v829
      %v841 = vmul.f32 %v814, %v833
      %v842 = vmul.f32 %v818, %v833
      %v843 = vadd.f32 %v787, %v835
      %v844 = vadd.f32 %v788, %v836
      %v845 = vadd.f32 %v789, %v837
      %v846 = vadd.f32 %v790, %v838
      %v847 = vadd.f32 %v791, %v839
      %v848 = vadd.f32 %v792, %v840
      %v849 = vadd.f32 %v793, %v841
      %v850 = vadd.f32 %v794, %v842
      %851 = vrot.lane.b32.xlu0 %v451, 112
      %v852 = vpop.permute.xlu0 %851
      %853 = vrot.lane.b32.xlu0 %v453, 112
      %v854 = vpop.permute.xlu0 %853
      %855 = vrot.lane.b32.xlu0 %v455, 112
      %v856 = vpop.permute.xlu0 %855
      %857 = vrot.lane.b32.xlu0 %v457, 112
      %v858 = vpop.permute.xlu0 %857
      %859 = vrot.lane.b32.xlu0 %v452, 112
      %v860 = vpop.permute.xlu0 %859
      %861 = vrot.lane.b32.xlu0 %v454, 112
      %v862 = vpop.permute.xlu0 %861
      %863 = vrot.lane.b32.xlu0 %v456, 112
      %v864 = vpop.permute.xlu0 %863
      %865 = vrot.lane.b32.xlu0 %v458, 112
      %v866 = vpop.permute.xlu0 %865
      %v867 = vsel %vm762, %v852, %v860
      %v868 = vsel %vm762, %v854, %v862
      %v869 = vsel %vm762, %v856, %v864
      %v870 = vsel %vm762, %v858, %v866
      %v871 = vsel %vm762, %v860, %v852
      %v872 = vsel %vm762, %v862, %v854
      %v873 = vsel %vm762, %v864, %v856
      %v874 = vsel %vm762, %v866, %v858
      %875 = vset.pattern.permute.xlu0 8
      %876 = vperm.xlu0 %875, %v349
      %v877 = vpop.permute.xlu0 %876
      %879 = vset.pattern.permute.xlu0 8
      %880 = vperm.xlu0 %879, %v350
      %v881 = vpop.permute.xlu0 %880
      %883 = vset.pattern.permute.xlu0 8
      %884 = vperm.xlu0 %883, %v351
      %v885 = vpop.permute.xlu0 %884
      %887 = vset.pattern.permute.xlu0 8
      %888 = vperm.xlu0 %887, %v352
      %v889 = vpop.permute.xlu0 %888
      %v891 = vmul.f32 %v867, %v877
      %v892 = vmul.f32 %v871, %v877
      %v893 = vmul.f32 %v868, %v881
      %v894 = vmul.f32 %v872, %v881
      %v895 = vmul.f32 %v869, %v885
      %v896 = vmul.f32 %v873, %v885
      %v897 = vmul.f32 %v870, %v889
      %v898 = vmul.f32 %v874, %v889
      %v899 = vadd.f32 %v843, %v891
      %v900 = vadd.f32 %v844, %v892
      %v901 = vadd.f32 %v845, %v893
      %v902 = vadd.f32 %v846, %v894
      %v903 = vadd.f32 %v847, %v895
      %v904 = vadd.f32 %v848, %v896
      %v905 = vadd.f32 %v849, %v897
      %v906 = vadd.f32 %v850, %v898
      %v907 = vlaneseq
      %v908 = vshrl.u32 %v907, 7
      %v909 = vsub.s32 3, %v908
      %v910 = vrot.slane %v353, %v909
      %v911 = vlaneseq
      %v912 = vshrl.u32 %v911, 7
      %v913 = vsub.s32 7, %v912
      %v914 = vrot.slane %v353, %v913
      %v917 = vlaneseq
      %v918 = vshrl.u32 %v917, 7
      %v919 = vsub.s32 3, %v918
      %v920 = vrot.slane %v910, %v919
      %v921 = vlaneseq
      %v922 = vshrl.u32 %v921, 7
      %v923 = vsub.s32 3, %v922
      %v924 = vrot.slane %v914, %v923
      %v925 = vmul.f32 %v899, %v920
      %v926 = vmul.f32 %v900, %v924
      %v927 = vmul.f32 %v901, %v920
      %v928 = vmul.f32 %v902, %v924
      %v929 = vmul.f32 %v903, %v920
      %v930 = vmul.f32 %v904, %v924
      %v931 = vmul.f32 %v905, %v920
      %v932 = vmul.f32 %v906, %v924
      %v933 = vadd.f32 %v738, %v925
      %v934 = vadd.f32 %v739, %v926
      %v935 = vadd.f32 %v740, %v927
      %v936 = vadd.f32 %v741, %v928
      %v937 = vadd.f32 %v742, %v929
      %v938 = vadd.f32 %v743, %v930
      %v939 = vadd.f32 %v744, %v931
      %v940 = vadd.f32 %v745, %v932
      %v941 = vpack.c.bf16 %v935, %v933
      %v942 = vpack.c.bf16 %v936, %v934
      %v943 = vpack.c.bf16 %v939, %v937
      %v944 = vpack.c.bf16 %v940, %v938
      %v949 = vunpack.c.l.b16 %v941
      %v950 = vunpack.c.l.b16 %v942
      %v951 = vunpack.c.h.b16 %v941
      %v952 = vunpack.c.h.b16 %v942
      %v953 = vunpack.c.l.b16 %v943
      %v954 = vunpack.c.l.b16 %v944
      %v955 = vunpack.c.h.b16 %v943
      %v956 = vunpack.c.h.b16 %v944
      %v957 = vpack.c.b16 %v950, %v949
      %v958 = vpack.c.b16 %v952, %v951
      %v959 = vpack.c.b16 %v954, %v953
      %v960 = vpack.c.b16 %v956, %v955
      %965 = vst [vmem:[%s259] sm:$0xff] %v957
      %966 = vst [vmem:[%s259 + $0x8] sm:$0xff] %v958
      %967 = vst [vmem:[%s259 + $0x10] sm:$0xff] %v959
      %968 = vst [vmem:[%s259 + $0x18] sm:$0xff] %v960
      %v969 = vadd.f32 %v933, %v934
      %970 = vadd.xlane.f32.xlu0 %v969
      %v971 = vpop.xlane.xlu0 %970
      %v972 = vadd.f32 %v935, %v936
      %973 = vadd.xlane.f32.xlu0 %v972
      %v974 = vpop.xlane.xlu0 %973
      %v975 = vadd.f32 %v937, %v938
      %976 = vadd.xlane.f32.xlu0 %v975
      %v977 = vpop.xlane.xlu0 %976
      %v978 = vadd.f32 %v939, %v940
      %979 = vadd.xlane.f32.xlu0 %v978
      %v980 = vpop.xlane.xlu0 %979
      %v981 = vmul.f32 %v933, %v933
      %v982 = vmul.f32 %v934, %v934
      %v983 = vmul.f32 %v935, %v935
      %v984 = vmul.f32 %v936, %v936
      %v985 = vmul.f32 %v937, %v937
      %v986 = vmul.f32 %v938, %v938
      %v987 = vmul.f32 %v939, %v939
      %v988 = vmul.f32 %v940, %v940
      %v989 = vadd.f32 %v981, %v982
      %990 = vadd.xlane.f32.xlu0 %v989
      %v991 = vpop.xlane.xlu0 %990
      %v992 = vadd.f32 %v983, %v984
      %993 = vadd.xlane.f32.xlu0 %v992
      %v994 = vpop.xlane.xlu0 %993
      %v995 = vadd.f32 %v985, %v986
      %996 = vadd.xlane.f32.xlu0 %v995
      %v997 = vpop.xlane.xlu0 %996
      %v998 = vadd.f32 %v987, %v988
      %999 = vadd.xlane.f32.xlu0 %v998
      %v1000 = vpop.xlane.xlu0 %999
      %vm1001 = vcmask 7168
      %v1002 = vsel %vm1001, %v971, %v991
      %v1003 = vsel %vm1001, %v974, %v994
      %v1004 = vsel %vm1001, %v977, %v997
      %v1005 = vsel %vm1001, %v980, %v1000
      %vm1006 = vcmask 15360
      %1007 = vst.msk [vmem:[%s264] sm:$0xff] %vm1006, %v1002
      %1008 = vst.msk [vmem:[%s264 + $0x8] sm:$0xff] %vm1006, %v1003
      %1009 = vst.msk [vmem:[%s264 + $0x10] sm:$0xff] %vm1006, %v1004
      %1010 = vst.msk [vmem:[%s264 + $0x18] sm:$0xff] %vm1006, %v1005
      %p1011 = scmp.lt.s32.totalorder %s18, 1
      %s1012 = scalar_select %p1011, %s18, 1
      %s1013 = smul.addr %s1012, 8
      %s1014 = smul.addr %s1013, 4
      %s1015 = scalar_lea.vmem %s5, %s1014
      %p1016 = scmp.lt.s32.totalorder %s18, 1
      %s1017 = scalar_select %p1016, %s18, 1
      %s1018 = smul.addr %s1017, 4
      %s1019 = smul.addr %s1018, 8
      %s1020 = scalar_lea.vmem %s6, %s1019
      // Predicated region
      $region41: #{bottleneckx_forward.5} parent=39 // pred_check
        %p1021 = pneg %p146
      $region42: #{bottleneckx_forward.5} parent=39 // pred_check_branch
        %1023 = sbr.rel (%p1021) target = $region44
      $region43: #{bottleneckx_forward.5} parent=39 // pred_region
        _
      $region44: #{bottleneckx_forward.5} parent=39 // pred_fallthru
        _
      // Predicated region
      $region45: #{bottleneckx_forward.5} parent=39 // pred_check
        %p1024 = pneg %p172
      $region46: #{bottleneckx_forward.5} parent=39 // pred_check_branch
        %1026 = sbr.rel (%p1024) target = $region48
      $region47: #{bottleneckx_forward.5} parent=39 // pred_region
        _
      $region48: #{bottleneckx_forward.5} parent=39 // pred_fallthru
        _
    $region40: #{bottleneckx_forward.5} parent=5 // pred_fallthru
      _
    %p1027 = scmp.le.s32.totalorder 2, %s13
    // Predicated region
    $region49: #{bottleneckx_forward.5} parent=5 // pred_check
      %p1028 = pneg %p1027
    $region50: #{bottleneckx_forward.5} parent=5 // pred_check_branch
      %1030 = sbr.rel (%p1028) target = $region52
    $region51: #{bottleneckx_forward.5} parent=5 // pred_region
      %s1031 = ssub.s32 %s13, 2
      // Predicated region
      $region53: #{bottleneckx_forward.5} parent=51 // pred_check
        %p1032 = pneg %p152
      $region54: #{bottleneckx_forward.5} parent=51 // pred_check_branch
        %1034 = sbr.rel (%p1032) target = $region56
      $region55: #{bottleneckx_forward.5} parent=51 // pred_region
        %p1035 = scmp.lt.s32.totalorder %s19, 1
        %s1036 = scalar_select %p1035, %s19, 1
        %s1037 = smul.addr %s1036, 8
        %s1038 = smul.addr %s1037, 4
        %s1039 = scalar_lea.vmem %s5, %s1038
      $region56: #{bottleneckx_forward.5} parent=51 // pred_fallthru
        _
      // Predicated region
      $region57: #{bottleneckx_forward.5} parent=51 // pred_check
        %p1040 = pneg %p178
      $region58: #{bottleneckx_forward.5} parent=51 // pred_check_branch
        %1042 = sbr.rel (%p1040) target = $region60
      $region59: #{bottleneckx_forward.5} parent=51 // pred_region
        %p1043 = scmp.lt.s32.totalorder %s19, 1
        %s1044 = scalar_select %p1043, %s19, 1
        %s1045 = smul.addr %s1044, 4
        %s1046 = smul.addr %s1045, 8
        %s1047 = scalar_lea.vmem %s6, %s1046
      $region60: #{bottleneckx_forward.5} parent=51 // pred_fallthru
        _
    $region52: #{bottleneckx_forward.5} parent=5 // pred_fallthru
      _
  $region6: #{bottleneckx_forward.5} parent=0 // loop_footer
    %s17 = sadd.s32 1, %s13
  $region7: #{bottleneckx_forward.5} parent=0 // loop_footer_branch
    %12 = sbr.rel target = $region3
  $region8: #{bottleneckx_forward.5} parent=0 // loop_exit
    _

</llo_original>
